<compile_context>
chip_gen: v7x
topology: tpu7x:2x2x1
jax: 0.10.0
libtpu: 0.0.40
codegen_flags: <defaults>
</compile_context>

<pallas_src>
import jax
import jax.numpy as jnp
from jax import lax
from jax.experimental import pallas as pl
from jax.experimental.pallas import tpu as pltpu

LATENT_DIM = 8      # autoencoder latent dim (decoder input)
HIDDEN_DIM = 32     # decoder hidden dim
EMBED_DIM = 256     # VisionLanguageAlign visual embedding dim
TEXT_DIM = 1024     # language feature dim (EVA02-CLIP EOT features)

TM_DEFAULT = 1024   # target M-tile (rows per grid step)


def _round_up(x, m):
    return (x + m - 1) // m * m


def _cdiv(a, b):
    return (a + b - 1) // b


# --------------------------------------------------------------------------
# Prep kernel (gridded over the text axis): all text-side math, executed once.
# Text-major outputs:
#   w_fused  = (tok @ w2^T) / exp(log_scale)                   [tt, HIDDEN]
#   bias_all = (tok @ b2^T) / exp(log_scale) + e_n@bias_lang^T + bias0   [tt, 1]
# --------------------------------------------------------------------------
def _prep_kernel(text_ref, wp_ref, bp_ref, w2_ref, b2_ref,
                 bias_lang_ref, bias0_ref, log_scale_ref,
                 wf_ref, ba_ref):
    f32 = jnp.float32
    e = text_ref[...].astype(f32)                                   # [tt, 1024]
    norm = jnp.sqrt(jnp.sum(e * e, axis=-1, keepdims=True))
    e_n = e / jnp.maximum(norm, 1e-12)                              # F.normalize(p=2)

    tok = jnp.dot(e_n * 0.5, wp_ref[...],
                  preferred_element_type=f32) + bp_ref[...]         # [tt, 256]

    inv_scale = jnp.exp(-log_scale_ref[0, 0])                       # 1 / exp(log_scale)

    # tok @ w2^T (contract the 256-dim), fold in inv_scale.
    wf = lax.dot_general(tok, w2_ref[...], (((1,), (1,)), ((), ())),
                         preferred_element_type=f32) * inv_scale    # [tt, HIDDEN]

    # Row-reductions for the bias terms (XLU): tok @ b2^T and e_n @ bias_lang^T.
    bf = jnp.sum(tok * b2_ref[...], axis=-1, keepdims=True) * inv_scale     # [tt, 1]
    bias_t = (jnp.sum(e_n * bias_lang_ref[...], axis=-1, keepdims=True)
              + bias0_ref[0, 0])                                            # [tt, 1]

    wf_ref[...] = wf
    ba_ref[...] = bf + bias_t


# --------------------------------------------------------------------------
# Main kernel, transposed layout (T on sublanes, M on lanes).  Per tile:
#   out^T = clamp( w_fused^T @ relu(w1^T @ x^T + b1^T) + bias_all^T, +-50000 )
# --------------------------------------------------------------------------
def _align_tile_kernel_tm(xt_ref, w1t_ref, b1t_ref, wft_ref, bat_ref, out_ref):
    f32 = jnp.float32
    h = jnp.dot(w1t_ref[...], xt_ref[...].astype(f32),
                preferred_element_type=f32) + b1t_ref[...]          # [HIDDEN, tm]
    h = jnp.maximum(h, 0.0)
    s = jnp.dot(wft_ref[...], h,
                preferred_element_type=f32) + bat_ref[...]          # [T_pad8, tm]
    out_ref[...] = jnp.clip(s, -50000.0, 50000.0).astype(out_ref.dtype)


# --------------------------------------------------------------------------
# Main kernel, row-major layout (M on sublanes, T on lanes).  Per tile:
#   out = clamp( relu(x @ w1 + b1) @ w_fused + bias_all, +-50000 )
# --------------------------------------------------------------------------
def _align_tile_kernel_mt(x_ref, w1_ref, b1_ref, wf_ref, ba_ref, out_ref):
    f32 = jnp.float32
    h = jnp.dot(x_ref[...].astype(f32), w1_ref[...],
                preferred_element_type=f32) + b1_ref[...]           # [TM, HIDDEN]
    h = jnp.maximum(h, 0.0)
    s = jnp.dot(h, wf_ref[...],
                preferred_element_type=f32) + ba_ref[...]           # [TM, T_pad]
    out_ref[...] = jnp.clip(s, -50000.0, 50000.0).astype(out_ref.dtype)


def init_params(key):
    """Deterministic synthetic parameters matching the module's shapes."""
    k1, k2, k3 = jax.random.split(key, 3)

    def uni(k, shape, fan_in):
        bound = 1.0 / jnp.sqrt(float(fan_in))
        return jax.random.uniform(k, shape, jnp.float32, -bound, bound)

    return {
        # autoencoder.decoder (2-layer MLP)
        "w1": uni(k1, (LATENT_DIM, HIDDEN_DIM), LATENT_DIM),
        "b1": jnp.zeros((1, HIDDEN_DIM), jnp.float32),
        "w2": uni(k2, (HIDDEN_DIM, EMBED_DIM), HIDDEN_DIM),
        "b2": jnp.zeros((1, EMBED_DIM), jnp.float32),
        # VisionLanguageAlign(256, 1024)
        "wp": uni(k3, (TEXT_DIM, EMBED_DIM), TEXT_DIM),      # text -> visual proj
        "bp": jnp.zeros((1, EMBED_DIM), jnp.float32),
        "bias_lang": jnp.zeros((1, TEXT_DIM), jnp.float32),  # nn.Parameter(zeros(1024))
        "bias0": jnp.full((1, 1), -4.6, jnp.float32),        # nn.Parameter([-4.6])
        "log_scale": jnp.zeros((1, 1), jnp.float32),         # nn.Parameter([0.0])
    }


def test_align_forward(x, text_feat, params, tm_default=TM_DEFAULT):
    """x: [B, N, LATENT_DIM]; text_feat: [T, TEXT_DIM].  Returns logits [B, N, T]."""
    B, N, L = x.shape
    T = text_feat.shape[0]
    M = B * N
    f32 = jnp.float32

    # Small text counts go to the transposed layout (T on sublanes, M on lanes)
    # so HBM writeback only pads T to 8 instead of 128.
    transposed = T < 128
    T_pad = _round_up(T, 8 if transposed else 128)

    # ---------------- prep: one-shot text-side fusion (gridded over T) -------
    if T_pad <= 512:
        tt = T_pad
    else:
        tt = 512
        T_pad = _round_up(T_pad, tt)      # keeps T_pad a multiple of 128 too

    text_pad = text_feat.astype(f32)
    if T_pad != T:
        text_pad = jnp.pad(text_pad, ((0, T_pad - T), (0, 0)))

    wf_t, ba_t = pl.pallas_call(
        _prep_kernel,
        out_shape=(jax.ShapeDtypeStruct((T_pad, HIDDEN_DIM), f32),
                   jax.ShapeDtypeStruct((T_pad, 1), f32)),
        grid=(T_pad // tt,),
        in_specs=[
            pl.BlockSpec((tt, TEXT_DIM), lambda i: (i, 0)),            # text tile
            pl.BlockSpec((TEXT_DIM, EMBED_DIM), lambda i: (0, 0)),     # wp
            pl.BlockSpec((1, EMBED_DIM), lambda i: (0, 0)),            # bp
            pl.BlockSpec((HIDDEN_DIM, EMBED_DIM), lambda i: (0, 0)),   # w2
            pl.BlockSpec((1, EMBED_DIM), lambda i: (0, 0)),            # b2
            pl.BlockSpec((1, TEXT_DIM), lambda i: (0, 0)),             # bias_lang
            pl.BlockSpec((1, 1), lambda i: (0, 0)),                    # bias0
            pl.BlockSpec((1, 1), lambda i: (0, 0)),                    # log_scale
        ],
        out_specs=(pl.BlockSpec((tt, HIDDEN_DIM), lambda i: (i, 0)),
                   pl.BlockSpec((tt, 1), lambda i: (i, 0))),
        compiler_params=pltpu.CompilerParams(dimension_semantics=("parallel",)),
    )(
        text_pad,
        params["wp"], params["bp"], params["w2"], params["b2"],
        params["bias_lang"], params["bias0"], params["log_scale"],
    )

    # ---------------- adaptive, balanced M tiling ----------------
    m_align = 128 if transposed else 8           # lanes vs sublanes
    n_tiles = max(1, _cdiv(M, tm_default))
    tm = _round_up(_cdiv(M, n_tiles), m_align)

    if not transposed:
        # VMEM-aware cap: double-buffered out + x tiles plus resident operands
        # must fit the 32 MiB scoped-VMEM default (safe on v7x 64 MiB physical).
        budget = 28 * 1024 * 1024
        resident = 8 * (HIDDEN_DIM * (T_pad + LATENT_DIM) + T_pad + HIDDEN_DIM)
        per_row = 8 * (T_pad + LATENT_DIM)       # 2 buffers x 4 bytes x row width
        tm_cap = max(8, (budget - resident) // per_row // 8 * 8)
        tm = min(tm, tm_cap)

    M_pad = _round_up(M, tm)
    grid = (M_pad // tm,)

    cost = pl.CostEstimate(
        flops=2 * M_pad * (LATENT_DIM * HIDDEN_DIM + HIDDEN_DIM * T_pad),
        transcendentals=0,
        bytes_accessed=4 * (M_pad * (LATENT_DIM + T_pad)
                            + HIDDEN_DIM * (LATENT_DIM + 1 + T_pad) + T_pad),
    )

    if transposed:
        # x as [LATENT, M]: lane-dense input tiles, no 16x vreg padding.
        x_t = x.reshape(M, L).astype(f32).T                          # [L, M]
        if M_pad != M:
            x_t = jnp.pad(x_t, ((0, 0), (0, M_pad - M)))
        w1t = params["w1"].astype(f32).T                             # [HIDDEN, LATENT]
        b1t = params["b1"].astype(f32).reshape(HIDDEN_DIM, 1)        # [HIDDEN, 1]

        out = pl.pallas_call(
            _align_tile_kernel_tm,
            out_shape=jax.ShapeDtypeStruct((T_pad, M_pad), f32),
            grid=grid,
            in_specs=[
                pl.BlockSpec((LATENT_DIM, tm), lambda i: (0, i)),        # x^T tile
                pl.BlockSpec((HIDDEN_DIM, LATENT_DIM), lambda i: (0, 0)),  # w1^T
                pl.BlockSpec((HIDDEN_DIM, 1), lambda i: (0, 0)),           # b1^T
                pl.BlockSpec((T_pad, HIDDEN_DIM), lambda i: (0, 0)),       # w_fused^T
                pl.BlockSpec((T_pad, 1), lambda i: (0, 0)),                # bias_all^T
            ],
            out_specs=pl.BlockSpec((T_pad, tm), lambda i: (0, i)),
            compiler_params=pltpu.CompilerParams(
                dimension_semantics=("parallel",)),
            cost_estimate=cost,
        )(x_t, w1t, b1t, wf_t, ba_t)
        # tiny [T, M] -> [B, N, T] fixup (T_pad == T when T is a multiple of 8)
        return out[:T, :M].T.reshape(B, N, T)

    # ---------------- row-major path (T >= 128) ----------------
    x_flat = x.reshape(M, L).astype(f32)
    if M_pad != M:
        x_flat = jnp.pad(x_flat, ((0, M_pad - M), (0, 0)))
    wf = wf_t.T                          # [HIDDEN, T_pad]  (tiny one-time transpose)
    ba = ba_t.reshape(1, T_pad)          # [1, T_pad]

    out = pl.pallas_call(
        _align_tile_kernel_mt,
        out_shape=jax.ShapeDtypeStruct((M_pad, T_pad), f32),
        grid=grid,
        in_specs=[
            pl.BlockSpec((tm, LATENT_DIM), lambda i: (i, 0)),            # x tile
            pl.BlockSpec((LATENT_DIM, HIDDEN_DIM), lambda i: (0, 0)),    # w1
            pl.BlockSpec((1, HIDDEN_DIM), lambda i: (0, 0)),             # b1
            pl.BlockSpec((HIDDEN_DIM, T_pad), lambda i: (0, 0)),         # w_fused
            pl.BlockSpec((1, T_pad), lambda i: (0, 0)),                  # bias_all
        ],
        out_specs=pl.BlockSpec((tm, T_pad), lambda i: (i, 0)),
        compiler_params=pltpu.CompilerParams(
            dimension_semantics=("parallel",)),
        cost_estimate=cost,
    )(x_flat, params["w1"].astype(f32), params["b1"].astype(f32), wf, ba)

    return out[:M, :T].reshape(B, N, T)


test_align_forward_jit = jax.jit(test_align_forward, static_argnums=(3,))


def reference_forward(x, text_feat, p):
    """Pure-jnp reference for correctness check (unfused math)."""
    B, N, L = x.shape
    xf = x.reshape(B * N, L)
    h = jnp.maximum(xf @ p["w1"] + p["b1"], 0.0)
    q = h @ p["w2"] + p["b2"]
    e = text_feat
    e_n = e / jnp.maximum(jnp.linalg.norm(e, axis=-1, keepdims=True), 1e-12)
    tok = (e_n * 0.5) @ p["wp"] + p["bp"]
    bias = e_n @ p["bias_lang"][0] + p["bias0"][0, 0]
    logits = (q @ tok.T) / jnp.exp(p["log_scale"][0, 0]) + bias[None, :]
    logits = jnp.clip(logits, -50000.0, 50000.0)
    return logits.reshape(B, N, -1)


if __name__ == "__main__":
    key = jax.random.PRNGKey(0)
    kx, kt, kp, kx2, kt2 = jax.random.split(key, 5)

    params = init_params(kp)

    # Case 1: small text count (T=8) -> transposed [T, M] output layout.
    # M = B*N = 1200 -> two balanced tiles of 640 lanes (600 real rows each).
    B, N, T = 2, 600, 8
    x = jax.random.normal(kx, (B, N, LATENT_DIM), jnp.float32)
    # Precomputed EVA02-CLIP text EOT features stand in for forward_text(text).
    text_feat = jax.random.normal(kt, (T, TEXT_DIM), jnp.float32)

    out = test_align_forward_jit(x, text_feat, params)
    out = jax.block_until_ready(out)
    ref = reference_forward(x, text_feat, params)
    assert out.shape == (B, N, T)
    assert jnp.allclose(out, ref, atol=1e-3, rtol=1e-3), "mismatch vs reference (T=8)"

    # Case 2: large text count (T=256) -> row-major [M, T] lane-dense layout.
    B2, N2, T2 = 1, 96, 256
    x2 = jax.random.normal(kx2, (B2, N2, LATENT_DIM), jnp.float32)
    text_feat2 = jax.random.normal(kt2, (T2, TEXT_DIM), jnp.float32)

    out2 = test_align_forward_jit(x2, text_feat2, params)
    out2 = jax.block_until_ready(out2)
    ref2 = reference_forward(x2, text_feat2, params)
    assert out2.shape == (B2, N2, T2)
    assert jnp.allclose(out2, ref2, atol=1e-3, rtol=1e-3), "mismatch vs reference (T=256)"

    print("KERNEL_OK")
</pallas_src>

<mosaic_0001>
module attributes {stable_mosaic.version = 11 : i64} {
  func.func @_prep_kernel(%arg0: i32, %arg1: memref<8x1024xf32, #tpu.memory_space<vmem>>, %arg2: memref<1024x256xf32, #tpu.memory_space<vmem>>, %arg3: memref<1x256xf32, #tpu.memory_space<vmem>>, %arg4: memref<32x256xf32, #tpu.memory_space<vmem>>, %arg5: memref<1x256xf32, #tpu.memory_space<vmem>>, %arg6: memref<1x1024xf32, #tpu.memory_space<vmem>>, %arg7: memref<1x1xf32, #tpu.memory_space<vmem>>, %arg8: memref<1x1xf32, #tpu.memory_space<vmem>>, %arg9: memref<8x32xf32, #tpu.memory_space<vmem>>, %arg10: memref<8x1xf32, #tpu.memory_space<vmem>>) attributes {dimension_semantics = [#tpu.dimension_semantics<parallel>], iteration_bounds = array<i64: 1>, scalar_prefetch = 0 : i64, scratch_operands = 0 : i64, tpu.core_type = #tpu.core_type<tc>, window_params = [{transform_indices = @transform_0, window_bounds = array<i64: 8, 1024>}, {pipeline_mode = #tpu.pipeline_mode<synchronous>, transform_indices = @transform_1, window_bounds = array<i64: 1024, 256>}, {pipeline_mode = #tpu.pipeline_mode<synchronous>, transform_indices = @transform_2, window_bounds = array<i64: 1, 256>}, {pipeline_mode = #tpu.pipeline_mode<synchronous>, transform_indices = @transform_3, window_bounds = array<i64: 32, 256>}, {pipeline_mode = #tpu.pipeline_mode<synchronous>, transform_indices = @transform_4, window_bounds = array<i64: 1, 256>}, {pipeline_mode = #tpu.pipeline_mode<synchronous>, transform_indices = @transform_5, window_bounds = array<i64: 1, 1024>}, {pipeline_mode = #tpu.pipeline_mode<synchronous>, transform_indices = @transform_6, window_bounds = array<i64: 1, 1>}, {pipeline_mode = #tpu.pipeline_mode<synchronous>, transform_indices = @transform_7, window_bounds = array<i64: 1, 1>}, {transform_indices = @transform_8, window_bounds = array<i64: 8, 32>}, {transform_indices = @transform_9, window_bounds = array<i64: 8, 1>}]} {
    %c0 = arith.constant 0 : index
    %c0_0 = arith.constant 0 : index
    %0 = vector.load %arg1[%c0, %c0_0] : memref<8x1024xf32, #tpu.memory_space<vmem>>, vector<8x1024xf32>
    %1 = arith.mulf %0, %0 : vector<8x1024xf32>
    %cst = arith.constant dense<0.000000e+00> : vector<8xf32>
    %2 = vector.multi_reduction <add>, %1, %cst [1] : vector<8x1024xf32> to vector<8xf32>
    %3 = vector.shape_cast %2 : vector<8xf32> to vector<8x1xf32>
    %4 = math.sqrt %3 : vector<8x1xf32>
    %cst_1 = arith.constant 9.99999996E-13 : f32
    %5 = vector.broadcast %cst_1 : f32 to vector<8x1xf32>
    %6 = arith.maximumf %4, %5 : vector<8x1xf32>
    %7 = vector.broadcast %6 : vector<8x1xf32> to vector<8x1024xf32>
    %8 = arith.divf %0, %7 : vector<8x1024xf32>
    %cst_2 = arith.constant 5.000000e-01 : f32
    %9 = vector.broadcast %cst_2 : f32 to vector<8x1024xf32>
    %10 = arith.mulf %8, %9 : vector<8x1024xf32>
    %c0_3 = arith.constant 0 : index
    %c0_4 = arith.constant 0 : index
    %11 = vector.load %arg2[%c0_3, %c0_4] : memref<1024x256xf32, #tpu.memory_space<vmem>>, vector<1024x256xf32>
    %cst_5 = arith.constant dense<0.000000e+00> : vector<8x256xf32>
    %12 = tpu.matmul %10, %11, %cst_5 {dimension_numbers = #tpu.dot_dimension_numbers<[1], [0], [0], [1], [0, 0, 1, 1], [], []>} : vector<8x1024xf32>, vector<1024x256xf32>, vector<8x256xf32> -> vector<8x256xf32>
    %c0_6 = arith.constant 0 : index
    %c0_7 = arith.constant 0 : index
    %13 = vector.load %arg3[%c0_6, %c0_7] : memref<1x256xf32, #tpu.memory_space<vmem>>, vector<1x256xf32>
    %14 = vector.broadcast %13 : vector<1x256xf32> to vector<8x256xf32>
    %15 = arith.addf %12, %14 : vector<8x256xf32>
    %c0_8 = arith.constant 0 : index
    %c0_9 = arith.constant 0 : index
    %16 = vector.load %arg8[%c0_8, %c0_9] : memref<1x1xf32, #tpu.memory_space<vmem>>, vector<1x1xf32>
    %17 = vector.extract %16[0, 0] : f32 from vector<1x1xf32>
    %cst_10 = arith.constant 0.000000e+00 : f32
    %18 = arith.subf %cst_10, %17 : f32
    %19 = math.exp %18 : f32
    %c0_11 = arith.constant 0 : index
    %c0_12 = arith.constant 0 : index
    %20 = vector.load %arg4[%c0_11, %c0_12] : memref<32x256xf32, #tpu.memory_space<vmem>>, vector<32x256xf32>
    %cst_13 = arith.constant dense<0.000000e+00> : vector<8x32xf32>
    %21 = tpu.matmul %15, %20, %cst_13 {dimension_numbers = #tpu.dot_dimension_numbers<[1], [1], [0], [0], [0, 0, 1, 0], [], []>} : vector<8x256xf32>, vector<32x256xf32>, vector<8x32xf32> -> vector<8x32xf32>
    %22 = vector.broadcast %19 : f32 to vector<8x32xf32>
    %23 = arith.mulf %21, %22 : vector<8x32xf32>
    %c0_14 = arith.constant 0 : index
    %c0_15 = arith.constant 0 : index
    %24 = vector.load %arg5[%c0_14, %c0_15] : memref<1x256xf32, #tpu.memory_space<vmem>>, vector<1x256xf32>
    %25 = vector.broadcast %24 : vector<1x256xf32> to vector<8x256xf32>
    %26 = arith.mulf %15, %25 : vector<8x256xf32>
    %cst_16 = arith.constant dense<0.000000e+00> : vector<8xf32>
    %27 = vector.multi_reduction <add>, %26, %cst_16 [1] : vector<8x256xf32> to vector<8xf32>
    %28 = vector.shape_cast %27 : vector<8xf32> to vector<8x1xf32>
    %29 = vector.broadcast %19 : f32 to vector<8x1xf32>
    %30 = arith.mulf %28, %29 : vector<8x1xf32>
    %c0_17 = arith.constant 0 : index
    %c0_18 = arith.constant 0 : index
    %31 = vector.load %arg6[%c0_17, %c0_18] : memref<1x1024xf32, #tpu.memory_space<vmem>>, vector<1x1024xf32>
    %32 = vector.broadcast %31 : vector<1x1024xf32> to vector<8x1024xf32>
    %33 = arith.mulf %8, %32 : vector<8x1024xf32>
    %cst_19 = arith.constant dense<0.000000e+00> : vector<8xf32>
    %34 = vector.multi_reduction <add>, %33, %cst_19 [1] : vector<8x1024xf32> to vector<8xf32>
    %35 = vector.shape_cast %34 : vector<8xf32> to vector<8x1xf32>
    %c0_20 = arith.constant 0 : index
    %c0_21 = arith.constant 0 : index
    %36 = vector.load %arg7[%c0_20, %c0_21] : memref<1x1xf32, #tpu.memory_space<vmem>>, vector<1x1xf32>
    %37 = vector.extract %36[0, 0] : f32 from vector<1x1xf32>
    %38 = vector.broadcast %37 : f32 to vector<8x1xf32>
    %39 = arith.addf %35, %38 : vector<8x1xf32>
    %c0_22 = arith.constant 0 : index
    %c0_23 = arith.constant 0 : index
    %40 = vector.load %arg9[%c0_22, %c0_23] : memref<8x32xf32, #tpu.memory_space<vmem>>, vector<8x32xf32>
    tpu.vector_store %arg9[%c0_22, %c0_23], %23 {strides = array<i32>} : memref<8x32xf32, #tpu.memory_space<vmem>>, vector<8x32xf32>,
    %41 = arith.addf %30, %39 : vector<8x1xf32>
    %c0_24 = arith.constant 0 : index
    %c0_25 = arith.constant 0 : index
    %42 = vector.load %arg10[%c0_24, %c0_25] : memref<8x1xf32, #tpu.memory_space<vmem>>, vector<8x1xf32>
    tpu.vector_store %arg10[%c0_24, %c0_25], %41 {strides = array<i32>} : memref<8x1xf32, #tpu.memory_space<vmem>>, vector<8x1xf32>,
    return
  }
  func.func @transform_0(%arg0: i32) -> (i32, i32) {
    %c0_i32 = arith.constant 0 : i32
    %c0_i32_0 = arith.constant 0 : i32
    return %arg0, %c0_i32 : i32, i32
  }
  func.func @transform_1(%arg0: i32) -> (i32, i32) {
    %c0_i32 = arith.constant 0 : i32
    %c0_i32_0 = arith.constant 0 : i32
    %c0_i32_1 = arith.constant 0 : i32
    return %c0_i32, %c0_i32_0 : i32, i32
  }
  func.func @transform_2(%arg0: i32) -> (i32, i32) {
    %c0_i32 = arith.constant 0 : i32
    %c0_i32_0 = arith.constant 0 : i32
    %c0_i32_1 = arith.constant 0 : i32
    return %c0_i32, %c0_i32_0 : i32, i32
  }
  func.func @transform_3(%arg0: i32) -> (i32, i32) {
    %c0_i32 = arith.constant 0 : i32
    %c0_i32_0 = arith.constant 0 : i32
    %c0_i32_1 = arith.constant 0 : i32
    return %c0_i32, %c0_i32_0 : i32, i32
  }
  func.func @transform_4(%arg0: i32) -> (i32, i32) {
    %c0_i32 = arith.constant 0 : i32
    %c0_i32_0 = arith.constant 0 : i32
    %c0_i32_1 = arith.constant 0 : i32
    return %c0_i32, %c0_i32_0 : i32, i32
  }
  func.func @transform_5(%arg0: i32) -> (i32, i32) {
    %c0_i32 = arith.constant 0 : i32
    %c0_i32_0 = arith.constant 0 : i32
    %c0_i32_1 = arith.constant 0 : i32
    return %c0_i32, %c0_i32_0 : i32, i32
  }
  func.func @transform_6(%arg0: i32) -> (i32, i32) {
    %c0_i32 = arith.constant 0 : i32
    %c0_i32_0 = arith.constant 0 : i32
    %c0_i32_1 = arith.constant 0 : i32
    return %c0_i32, %c0_i32_0 : i32, i32
  }
  func.func @transform_7(%arg0: i32) -> (i32, i32) {
    %c0_i32 = arith.constant 0 : i32
    %c0_i32_0 = arith.constant 0 : i32
    %c0_i32_1 = arith.constant 0 : i32
    return %c0_i32, %c0_i32_0 : i32, i32
  }
  func.func @transform_8(%arg0: i32) -> (i32, i32) {
    %c0_i32 = arith.constant 0 : i32
    %c0_i32_0 = arith.constant 0 : i32
    return %arg0, %c0_i32 : i32, i32
  }
  func.func @transform_9(%arg0: i32) -> (i32, i32) {
    %c0_i32 = arith.constant 0 : i32
    %c0_i32_0 = arith.constant 0 : i32
    return %arg0, %c0_i32 : i32, i32
  }
}

module attributes {stable_mosaic.version = 11 : i64} {
  func.func @_align_tile_kernel_tm(%arg0: i32, %arg1: memref<8x640xf32, #tpu.memory_space<vmem>>, %arg2: memref<32x8xf32, #tpu.memory_space<vmem>>, %arg3: memref<32x1xf32, #tpu.memory_space<vmem>>, %arg4: memref<8x32xf32, #tpu.memory_space<vmem>>, %arg5: memref<8x1xf32, #tpu.memory_space<vmem>>, %arg6: memref<8x640xf32, #tpu.memory_space<vmem>>) attributes {dimension_semantics = [#tpu.dimension_semantics<parallel>], iteration_bounds = array<i64: 2>, scalar_prefetch = 0 : i64, scratch_operands = 0 : i64, tpu.core_type = #tpu.core_type<tc>, window_params = [{transform_indices = @transform_0, window_bounds = array<i64: 8, 640>}, {pipeline_mode = #tpu.pipeline_mode<synchronous>, transform_indices = @transform_1, window_bounds = array<i64: 32, 8>}, {pipeline_mode = #tpu.pipeline_mode<synchronous>, transform_indices = @transform_2, window_bounds = array<i64: 32, 1>}, {pipeline_mode = #tpu.pipeline_mode<synchronous>, transform_indices = @transform_3, window_bounds = array<i64: 8, 32>}, {pipeline_mode = #tpu.pipeline_mode<synchronous>, transform_indices = @transform_4, window_bounds = array<i64: 8, 1>}, {transform_indices = @transform_5, window_bounds = array<i64: 8, 640>}]} {
    %c0 = arith.constant 0 : index
    %c0_0 = arith.constant 0 : index
    %0 = vector.load %arg2[%c0, %c0_0] : memref<32x8xf32, #tpu.memory_space<vmem>>, vector<32x8xf32>
    %c0_1 = arith.constant 0 : index
    %c0_2 = arith.constant 0 : index
    %1 = vector.load %arg1[%c0_1, %c0_2] : memref<8x640xf32, #tpu.memory_space<vmem>>, vector<8x640xf32>
    %cst = arith.constant dense<0.000000e+00> : vector<32x640xf32>
    %2 = tpu.matmul %0, %1, %cst {dimension_numbers = #tpu.dot_dimension_numbers<[1], [0], [0], [1], [0, 0, 1, 1], [], []>} : vector<32x8xf32>, vector<8x640xf32>, vector<32x640xf32> -> vector<32x640xf32>
    %c0_3 = arith.constant 0 : index
    %c0_4 = arith.constant 0 : index
    %3 = vector.load %arg3[%c0_3, %c0_4] : memref<32x1xf32, #tpu.memory_space<vmem>>, vector<32x1xf32>
    %4 = vector.broadcast %3 : vector<32x1xf32> to vector<32x640xf32>
    %5 = arith.addf %2, %4 : vector<32x640xf32>
    %cst_5 = arith.constant 0.000000e+00 : f32
    %6 = vector.broadcast %cst_5 : f32 to vector<32x640xf32>
    %7 = arith.maximumf %5, %6 : vector<32x640xf32>
    %c0_6 = arith.constant 0 : index
    %c0_7 = arith.constant 0 : index
    %8 = vector.load %arg4[%c0_6, %c0_7] : memref<8x32xf32, #tpu.memory_space<vmem>>, vector<8x32xf32>
    %cst_8 = arith.constant dense<0.000000e+00> : vector<8x640xf32>
    %9 = tpu.matmul %8, %7, %cst_8 {dimension_numbers = #tpu.dot_dimension_numbers<[1], [0], [0], [1], [0, 0, 1, 1], [], []>} : vector<8x32xf32>, vector<32x640xf32>, vector<8x640xf32> -> vector<8x640xf32>
    %c0_9 = arith.constant 0 : index
    %c0_10 = arith.constant 0 : index
    %10 = vector.load %arg5[%c0_9, %c0_10] : memref<8x1xf32, #tpu.memory_space<vmem>>, vector<8x1xf32>
    %11 = vector.broadcast %10 : vector<8x1xf32> to vector<8x640xf32>
    %12 = arith.addf %9, %11 : vector<8x640xf32>
    %cst_11 = arith.constant -5.000000e+04 : f32
    %cst_12 = arith.constant 5.000000e+04 : f32
    %13 = vector.broadcast %cst_11 : f32 to vector<8x640xf32>
    %14 = arith.maximumf %13, %12 : vector<8x640xf32>
    %15 = vector.broadcast %cst_12 : f32 to vector<8x640xf32>
    %16 = arith.minimumf %15, %14 : vector<8x640xf32>
    %c0_13 = arith.constant 0 : index
    %c0_14 = arith.constant 0 : index
    %17 = vector.load %arg6[%c0_13, %c0_14] : memref<8x640xf32, #tpu.memory_space<vmem>>, vector<8x640xf32>
    tpu.vector_store %arg6[%c0_13, %c0_14], %16 {strides = array<i32>} : memref<8x640xf32, #tpu.memory_space<vmem>>, vector<8x640xf32>,
    return
  }
  func.func @transform_0(%arg0: i32) -> (i32, i32) {
    %c0_i32 = arith.constant 0 : i32
    %c0_i32_0 = arith.constant 0 : i32
    return %c0_i32, %arg0 : i32, i32
  }
  func.func @transform_1(%arg0: i32) -> (i32, i32) {
    %c0_i32 = arith.constant 0 : i32
    %c0_i32_0 = arith.constant 0 : i32
    %c0_i32_1 = arith.constant 0 : i32
    return %c0_i32, %c0_i32_0 : i32, i32
  }
  func.func @transform_2(%arg0: i32) -> (i32, i32) {
    %c0_i32 = arith.constant 0 : i32
    %c0_i32_0 = arith.constant 0 : i32
    %c0_i32_1 = arith.constant 0 : i32
    return %c0_i32, %c0_i32_0 : i32, i32
  }
  func.func @transform_3(%arg0: i32) -> (i32, i32) {
    %c0_i32 = arith.constant 0 : i32
    %c0_i32_0 = arith.constant 0 : i32
    %c0_i32_1 = arith.constant 0 : i32
    return %c0_i32, %c0_i32_0 : i32, i32
  }
  func.func @transform_4(%arg0: i32) -> (i32, i32) {
    %c0_i32 = arith.constant 0 : i32
    %c0_i32_0 = arith.constant 0 : i32
    %c0_i32_1 = arith.constant 0 : i32
    return %c0_i32, %c0_i32_0 : i32, i32
  }
  func.func @transform_5(%arg0: i32) -> (i32, i32) {
    %c0_i32 = arith.constant 0 : i32
    %c0_i32_0 = arith.constant 0 : i32
    return %c0_i32, %arg0 : i32, i32
  }
}

</mosaic_0001>

<llo_original>
// kernel: test_align_forward.3
$region0: #{test_align_forward.3}
  #allocation0 [shape = 'u32[]', space=smem, size = 0x4, offset = 0x4, fixed_abs, tag = 'smem constant byte address 0x4 - core index']
  #allocation1 [shape = 'u32[144,128]{1,0:T(1,128)}', space=vmem, size = 0x12000, scoped, tag = 'internal scratch']
  %s0 = inlined_call_operand.vmem [shape: f32[8,1280], index: 0, kind: input, shape index: {}]
  %s1 = inlined_call_operand.vmem [shape: f32[32,8], index: 1, kind: input, shape index: {}]
  %s2 = inlined_call_operand.vmem [shape: f32[32,1], index: 2, kind: input, shape index: {}]
  %s3 = inlined_call_operand.vmem [shape: f32[8,32], index: 3, kind: input, shape index: {}]
  %s4 = inlined_call_operand.vmem [shape: f32[8,1], index: 4, kind: input, shape index: {}]
  %s5 = inlined_call_operand.vmem [shape: f32[8,1280], index: 5, kind: output, shape index: {}]
  %s6 = sld [smem:[#allocation0]]
  $region53: #{test_align_forward.3} parent=0
    _
  %s8 = ssub.s32 1, %s6
  %s9 = scalar_select 0, %s8, %s6
  loop: start=0, step=1, limit=4
  $region2: #{test_align_forward.3} parent=0 // loop_pre_header
    _
  $region3: #{test_align_forward.3} parent=0 // loop_header
    %s11 = sphi 0, %s15
    %p12 = scmp.ge.s32.totalorder %s11, 4
    %s21 = sphi 0, %s23
    %s24 = sphi 0, %s21
    %s25 = sphi 0, %s24
    %s41 = sphi 0, %s25
    %s45 = sphi 0, %s45
    %s47 = sphi 0, %s45
    %s48 = sphi 0, %s47
    %s62 = sphi 0, %s48
    %s66 = sphi 0, %s66
    %s68 = sphi 0, %s66
    %s69 = sphi 0, %s68
    %s83 = sphi 0, %s69
    %s87 = sphi 0, %s87
    %s89 = sphi 0, %s87
    %s90 = sphi 0, %s89
    %s104 = sphi 0, %s90
    %s108 = sphi 0, %s108
    %s110 = sphi 0, %s108
    %s111 = sphi 0, %s110
    %s125 = sphi 0, %s111
    %s131 = sphi 0, %s133
    %s134 = sphi 0, %s131
    %s135 = sphi 0, %s134
    %s151 = sphi 0, %s135
  $region4: #{test_align_forward.3} parent=0 // loop_header_branch
    %14 = sbr.rel (%p12) target = $region8
  $region5: #{test_align_forward.3} parent=0 // loop_body
    %s16 = ssub.s32 %s11, 1
    %s17 = ssub.s32 %s11, 2
    %s18 = sadd.s32 %s11, 1
    %s19 = ssub.s32 %s11, %s18
    %p20 = scmp.eq.s32.totalorder %s19, 0
    %s22 = sadd.s32 %s21, 1
    %s23 = scalar_select %p20, %s21, %s22
    %p26 = pneg %p20
    %p27 = scmp.eq.s32.totalorder %s11, 1
    %p28 = por %p26, %p27
    %p29 = scmp.ne.s32.totalorder %s21, %s24
    %p30 = scmp.eq.s32.totalorder %s11, 0
    %p31 = por %p29, %p30
    %p32 = scmp.ne.s32.totalorder %s21, %s24
    %p33 = scmp.eq.s32.totalorder %s16, 1
    %p34 = por %p32, %p33
    %p35 = scmp.ne.s32.totalorder %s24, %s25
    %p36 = scmp.eq.s32.totalorder %s16, 0
    %p37 = por %p35, %p36
    %p38 = scmp.ne.s32.totalorder %s24, %s25
    %p39 = scmp.eq.s32.totalorder %s17, 1
    %p40 = por %p38, %p39
    %p42 = scmp.ne.s32.totalorder %s25, %s41
    %p43 = scmp.eq.s32.totalorder %s17, 0
    %p44 = por %p42, %p43
    %s46 = sadd.s32 %s45, 1
    %p49 = scmp.eq.s32.totalorder %s11, 1
    %p50 = scmp.ne.s32.totalorder %s45, %s47
    %p51 = scmp.eq.s32.totalorder %s11, 0
    %p52 = por %p50, %p51
    %p53 = scmp.ne.s32.totalorder %s45, %s47
    %p54 = scmp.eq.s32.totalorder %s16, 1
    %p55 = por %p53, %p54
    %p56 = scmp.ne.s32.totalorder %s47, %s48
    %p57 = scmp.eq.s32.totalorder %s16, 0
    %p58 = por %p56, %p57
    %p59 = scmp.ne.s32.totalorder %s47, %s48
    %p60 = scmp.eq.s32.totalorder %s17, 1
    %p61 = por %p59, %p60
    %p63 = scmp.ne.s32.totalorder %s48, %s62
    %p64 = scmp.eq.s32.totalorder %s17, 0
    %p65 = por %p63, %p64
    %s67 = sadd.s32 %s66, 1
    %p70 = scmp.eq.s32.totalorder %s11, 1
    %p71 = scmp.ne.s32.totalorder %s66, %s68
    %p72 = scmp.eq.s32.totalorder %s11, 0
    %p73 = por %p71, %p72
    %p74 = scmp.ne.s32.totalorder %s66, %s68
    %p75 = scmp.eq.s32.totalorder %s16, 1
    %p76 = por %p74, %p75
    %p77 = scmp.ne.s32.totalorder %s68, %s69
    %p78 = scmp.eq.s32.totalorder %s16, 0
    %p79 = por %p77, %p78
    %p80 = scmp.ne.s32.totalorder %s68, %s69
    %p81 = scmp.eq.s32.totalorder %s17, 1
    %p82 = por %p80, %p81
    %p84 = scmp.ne.s32.totalorder %s69, %s83
    %p85 = scmp.eq.s32.totalorder %s17, 0
    %p86 = por %p84, %p85
    %s88 = sadd.s32 %s87, 1
    %p91 = scmp.eq.s32.totalorder %s11, 1
    %p92 = scmp.ne.s32.totalorder %s87, %s89
    %p93 = scmp.eq.s32.totalorder %s11, 0
    %p94 = por %p92, %p93
    %p95 = scmp.ne.s32.totalorder %s87, %s89
    %p96 = scmp.eq.s32.totalorder %s16, 1
    %p97 = por %p95, %p96
    %p98 = scmp.ne.s32.totalorder %s89, %s90
    %p99 = scmp.eq.s32.totalorder %s16, 0
    %p100 = por %p98, %p99
    %p101 = scmp.ne.s32.totalorder %s89, %s90
    %p102 = scmp.eq.s32.totalorder %s17, 1
    %p103 = por %p101, %p102
    %p105 = scmp.ne.s32.totalorder %s90, %s104
    %p106 = scmp.eq.s32.totalorder %s17, 0
    %p107 = por %p105, %p106
    %s109 = sadd.s32 %s108, 1
    %p112 = scmp.eq.s32.totalorder %s11, 1
    %p113 = scmp.ne.s32.totalorder %s108, %s110
    %p114 = scmp.eq.s32.totalorder %s11, 0
    %p115 = por %p113, %p114
    %p116 = scmp.ne.s32.totalorder %s108, %s110
    %p117 = scmp.eq.s32.totalorder %s16, 1
    %p118 = por %p116, %p117
    %p119 = scmp.ne.s32.totalorder %s110, %s111
    %p120 = scmp.eq.s32.totalorder %s16, 0
    %p121 = por %p119, %p120
    %p122 = scmp.ne.s32.totalorder %s110, %s111
    %p123 = scmp.eq.s32.totalorder %s17, 1
    %p124 = por %p122, %p123
    %p126 = scmp.ne.s32.totalorder %s111, %s125
    %p127 = scmp.eq.s32.totalorder %s17, 0
    %p128 = por %p126, %p127
    %s129 = ssub.s32 %s11, %s18
    %p130 = scmp.eq.s32.totalorder %s129, 0
    %s132 = sadd.s32 %s131, 1
    %s133 = scalar_select %p130, %s131, %s132
    %p136 = pneg %p130
    %p137 = scmp.eq.s32.totalorder %s11, 1
    %p138 = por %p136, %p137
    %p139 = scmp.ne.s32.totalorder %s131, %s134
    %p140 = scmp.eq.s32.totalorder %s11, 0
    %p141 = por %p139, %p140
    %p142 = scmp.ne.s32.totalorder %s131, %s134
    %p143 = scmp.eq.s32.totalorder %s16, 1
    %p144 = por %p142, %p143
    %p145 = scmp.ne.s32.totalorder %s134, %s135
    %p146 = scmp.eq.s32.totalorder %s16, 0
    %p147 = por %p145, %p146
    %p148 = scmp.ne.s32.totalorder %s134, %s135
    %p149 = scmp.eq.s32.totalorder %s17, 1
    %p150 = por %p148, %p149
    %p152 = scmp.ne.s32.totalorder %s135, %s151
    %p153 = scmp.eq.s32.totalorder %s17, 0
    %p154 = por %p152, %p153
    %p155 = scmp.le.s32.totalorder 1, %s11
    %p156 = scmp.lt.s32.totalorder %s11, 3
    %p157 = pnand %p155, %p156
    %p158 = pneg %p157
    // Predicated region
    $region9: #{test_align_forward.3} parent=5 // pred_check
      _
    $region10: #{test_align_forward.3} parent=5 // pred_check_branch
      %160 = sbr.rel (%p157) target = $region12
    $region11: #{test_align_forward.3} parent=5 // pred_region
      %s161 = ssub.s32 %s11, 1
      // Predicated region
      $region13: #{test_align_forward.3} parent=11 // pred_check
        %p162 = pneg %p58
      $region14: #{test_align_forward.3} parent=11 // pred_check_branch
        %164 = sbr.rel (%p162) target = $region16
      $region15: #{test_align_forward.3} parent=11 // pred_region
        _
      $region16: #{test_align_forward.3} parent=11 // pred_fallthru
        _
      // Predicated region
      $region17: #{test_align_forward.3} parent=11 // pred_check
        %p165 = pneg %p79
      $region18: #{test_align_forward.3} parent=11 // pred_check_branch
        %167 = sbr.rel (%p165) target = $region20
      $region19: #{test_align_forward.3} parent=11 // pred_region
        _
      $region20: #{test_align_forward.3} parent=11 // pred_fallthru
        _
      // Predicated region
      $region21: #{test_align_forward.3} parent=11 // pred_check
        %p168 = pneg %p100
      $region22: #{test_align_forward.3} parent=11 // pred_check_branch
        %170 = sbr.rel (%p168) target = $region24
      $region23: #{test_align_forward.3} parent=11 // pred_region
        _
      $region24: #{test_align_forward.3} parent=11 // pred_fallthru
        _
      // Predicated region
      $region25: #{test_align_forward.3} parent=11 // pred_check
        %p171 = pneg %p121
      $region26: #{test_align_forward.3} parent=11 // pred_check_branch
        %173 = sbr.rel (%p171) target = $region28
      $region27: #{test_align_forward.3} parent=11 // pred_region
        _
      $region28: #{test_align_forward.3} parent=11 // pred_fallthru
        _
    $region12: #{test_align_forward.3} parent=5 // pred_fallthru
      _
    %p174 = scmp.lt.s32.totalorder %s11, 2
    // Predicated region
    $region29: #{test_align_forward.3} parent=5 // pred_check
      %p175 = pneg %p174
    $region30: #{test_align_forward.3} parent=5 // pred_check_branch
      %177 = sbr.rel (%p175) target = $region32
    $region31: #{test_align_forward.3} parent=5 // pred_region
      // Predicated region
      $region33: #{test_align_forward.3} parent=31 // pred_check
        %p178 = pneg %p31
      $region34: #{test_align_forward.3} parent=31 // pred_check_branch
        %180 = sbr.rel (%p178) target = $region36
      $region35: #{test_align_forward.3} parent=31 // pred_region
        %s181 = smul.u32 5, %s11
        %p182 = scmp.lt.s32.totalorder %s181, 9
        %s183 = scalar_select %p182, %s181, 9
        %s184 = smul.addr %s183, 8
        %s185 = scalar_lea.vmem %s0, %s184
        %s186 = smul.u32 5, %s11
      $region36: #{test_align_forward.3} parent=31 // pred_fallthru
        _
    $region32: #{test_align_forward.3} parent=5 // pred_fallthru
      _
    %p187 = scmp.le.s32.totalorder 1, %s11
    %p188 = scmp.lt.s32.totalorder %s11, 3
    %p189 = pnand %p187, %p188
    %p190 = pneg %p189
    // Predicated region
    $region37: #{test_align_forward.3} parent=5 // pred_check
      _
    $region38: #{test_align_forward.3} parent=5 // pred_check_branch
      %192 = sbr.rel (%p189) target = $region40
    $region39: #{test_align_forward.3} parent=5 // pred_region
      %s193 = ssub.s32 %s11, 1
      %s194 = smul.u32 5, %s16
      %p195 = scmp.lt.s32.totalorder %s194, 9
      %s196 = scalar_select %p195, %s194, 9
      %s197 = smul.addr %s196, 8
      %s198 = scalar_lea.vmem %s0, %s197
      %p199 = pneg %p37
      %p200 = pneg %p34
      %p201 = pneg %p58
      %p202 = pneg %p55
      %p203 = pneg %p79
      %p204 = pneg %p76
      %p205 = pneg %p100
      %p206 = pneg %p97
      %p207 = pneg %p121
      %p208 = pneg %p118
      %p209 = pneg %p147
      %p210 = pneg %p144
      %s211 = smul.u32 5, %s16
      %p212 = scmp.lt.s32.totalorder %s211, 9
      %s213 = scalar_select %p212, %s211, 9
      %s214 = smul.addr %s213, 8
      %s215 = scalar_lea.vmem %s5, %s214
      %s216 = smul.u32 5, %s16
      %p217 = scmp.lt.s32.totalorder %s216, 9
      %s218 = scalar_select %p217, %s216, 9
      %s219 = smul.addr %s218, 8
      %s220 = scalar_lea.vmem %s0, %s219
      %s221 = smul.u32 5, %s16
      %s222 = smul.u32 5, %s16
      %p223 = scmp.lt.s32.totalorder %s222, 9
      %s224 = scalar_select %p223, %s222, 9
      %s225 = smul.addr %s224, 8
      %s226 = scalar_lea.vmem %s5, %s225
      %s227 = smul.u32 5, %s16
      %v228 = vld [vmem:[%s1] sm:$0xff]
      %v229 = vld [vmem:[%s1 + $0x8] sm:$0xff]
      %v230 = vld [vmem:[%s1 + $0x10] sm:$0xff]
      %v231 = vld [vmem:[%s1 + $0x18] sm:$0xff]
      %v232 = vld [vmem:[%s220] sm:$0xff]
      %v233 = vld [vmem:[%s220 + $0x8] sm:$0xff]
      %v234 = vld [vmem:[%s220 + $0x10] sm:$0xff]
      %v235 = vld [vmem:[%s220 + $0x18] sm:$0xff]
      %v236 = vld [vmem:[%s220 + $0x20] sm:$0xff]
      %v237 = vld [vmem:[%s2] sm:$0xff]
      %v238 = vld [vmem:[%s2 + $0x8] sm:$0xff]
      %v239 = vld [vmem:[%s2 + $0x10] sm:$0xff]
      %v240 = vld [vmem:[%s2 + $0x18] sm:$0xff]
      %242 = vset.pattern.permute.xlu0 0
      %243 = vperm.xlu0 %242, %v237
      %v244 = vpop.permute.xlu0 %243
      %247 = vset.pattern.permute.xlu0 0
      %248 = vperm.xlu0 %247, %v238
      %v249 = vpop.permute.xlu0 %248
      %252 = vset.pattern.permute.xlu0 0
      %253 = vperm.xlu0 %252, %v239
      %v254 = vpop.permute.xlu0 %253
      %257 = vset.pattern.permute.xlu0 0
      %258 = vperm.xlu0 %257, %v240
      %v259 = vpop.permute.xlu0 %258
      %vm261 = vcmask 64512
      %v263 = vsel %vm261, %v228, 0
      %v266 = vsel %vm261, %v229, 0
      %v269 = vsel %vm261, %v230, 0
      %v272 = vsel %vm261, %v231, 0
      %274 = vmatprep.subr.mxu0 %v233
      %275 = vmatpush1.msra.mxu0 %v232
      %276 = vmatprep.subr.mxu0 0.0
      %277 = vmatpush1.msra.mxu0 0.0
      %278 = vmatprep.subr.mxu0 0.0
      %279 = vmatpush1.msra.mxu0 0.0
      %280 = vmatprep.subr.mxu0 0.0
      %281 = vmatpush1.msra.mxu0 0.0
      %282 = vmatprep.subr.mxu0 0.0
      %283 = vmatpush1.msra.mxu0 0.0
      %284 = vmatprep.subr.mxu0 0.0
      %285 = vmatpush1.msra.mxu0 0.0
      %286 = vmatprep.subr.mxu0 0.0
      %287 = vmatpush1.msra.mxu0 0.0
      %288 = vmatprep.subr.mxu0 0.0
      %289 = vmatpush1.msra.mxu0 0.0
      %290 = vmatprep.subr.mxu0 0.0
      %291 = vmatpush1.msra.mxu0 0.0
      %292 = vmatprep.subr.mxu0 0.0
      %293 = vmatpush1.msra.mxu0 0.0
      %294 = vmatprep.subr.mxu0 0.0
      %295 = vmatpush1.msra.mxu0 0.0
      %296 = vmatprep.subr.mxu0 0.0
      %297 = vmatpush1.msra.mxu0 0.0
      %298 = vmatprep.subr.mxu0 0.0
      %299 = vmatpush1.msra.mxu0 0.0
      %300 = vmatprep.subr.mxu0 0.0
      %301 = vmatpush1.msra.mxu0 0.0
      %302 = vmatprep.subr.mxu0 0.0
      %303 = vmatpush1.msra.mxu0 0.0
      %304 = vmatprep.subr.mxu0 0.0
      %305 = vmatpush1.msra.mxu0 0.0
      %306 = vmatprep.subr.mxu0 0.0
      %307 = vmatpush1.msra.mxu0 0.0
      %308 = vmatprep.subr.mxu0 0.0
      %309 = vmatpush1.msra.mxu0 0.0
      %310 = vmatprep.subr.mxu0 0.0
      %311 = vmatpush1.msra.mxu0 0.0
      %312 = vmatprep.subr.mxu0 0.0
      %313 = vmatpush1.msra.mxu0 0.0
      %314 = vmatprep.subr.mxu0 0.0
      %315 = vmatpush1.msra.mxu0 0.0
      %316 = vmatprep.subr.mxu0 0.0
      %317 = vmatpush1.msra.mxu0 0.0
      %318 = vmatprep.subr.mxu0 0.0
      %319 = vmatpush1.msra.mxu0 0.0
      %320 = vmatprep.subr.mxu0 0.0
      %321 = vmatpush1.msra.mxu0 0.0
      %322 = vmatprep.subr.mxu0 0.0
      %323 = vmatpush1.msra.mxu0 0.0
      %324 = vmatprep.subr.mxu0 0.0
      %325 = vmatpush1.msra.mxu0 0.0
      %326 = vmatprep.subr.mxu0 0.0
      %327 = vmatpush1.msra.mxu0 0.0
      %328 = vmatprep.subr.mxu0 0.0
      %329 = vmatpush1.msra.mxu0 0.0
      %330 = vmatprep.subr.mxu0 0.0
      %331 = vmatpush1.msra.mxu0 0.0
      %332 = vmatprep.subr.mxu0 0.0
      %333 = vmatpush1.msra.mxu0 0.0
      %334 = vmatprep.subr.mxu0 0.0
      %335 = vmatpush1.msra.mxu0 0.0
      %336 = vmatprep.subr.mxu0 0.0
      %337 = vmatpush1.msra.mxu0 0.0
      %338 = vmatprep.mubr.f32.mxu0 0.0
      %339 = vmatmul.mubr.f32.gmra.mrb[0].mxu0 %v263
      %v340 = vpop.f32.mrb[0].mxu0
      %v341 = vadd.f32 %v244, %v340
      %v342 = vpop.f32.mrb[0].mxu0
      %v343 = vadd.f32 %v244, %v342
      %344 = vmatprep.mubr.f32.mxu0 0.0
      %345 = vmatmul.mubr.f32.gmra.mrb[0].mxu0 %v266
      %v346 = vpop.f32.mrb[0].mxu0
      %v347 = vadd.f32 %v249, %v346
      %v348 = vpop.f32.mrb[0].mxu0
      %v349 = vadd.f32 %v249, %v348
      %350 = vmatprep.mubr.f32.mxu0 0.0
      %351 = vmatmul.mubr.f32.gmra.mrb[0].mxu0 %v269
      %v352 = vpop.f32.mrb[0].mxu0
      %v353 = vadd.f32 %v254, %v352
      %v354 = vpop.f32.mrb[0].mxu0
      %v355 = vadd.f32 %v254, %v354
      %356 = vmatprep.mubr.f32.mxu0 0.0
      %357 = vmatmul.mubr.f32.gmra.mrb[0].mxu0 %v272
      %v358 = vpop.f32.mrb[0].mxu0
      %v359 = vadd.f32 %v259, %v358
      %v360 = vpop.f32.mrb[0].mxu0
      %v361 = vadd.f32 %v259, %v360
      %362 = vdwg.mxu0
      %363 = vmatprep.subr.mxu0 %v235
      %364 = vmatpush1.msra.mxu0 %v234
      %365 = vmatprep.subr.mxu0 0.0
      %366 = vmatpush1.msra.mxu0 0.0
      %367 = vmatprep.subr.mxu0 0.0
      %368 = vmatpush1.msra.mxu0 0.0
      %369 = vmatprep.subr.mxu0 0.0
      %370 = vmatpush1.msra.mxu0 0.0
      %371 = vmatprep.subr.mxu0 0.0
      %372 = vmatpush1.msra.mxu0 0.0
      %373 = vmatprep.subr.mxu0 0.0
      %374 = vmatpush1.msra.mxu0 0.0
      %375 = vmatprep.subr.mxu0 0.0
      %376 = vmatpush1.msra.mxu0 0.0
      %377 = vmatprep.subr.mxu0 0.0
      %378 = vmatpush1.msra.mxu0 0.0
      %379 = vmatprep.subr.mxu0 0.0
      %380 = vmatpush1.msra.mxu0 0.0
      %381 = vmatprep.subr.mxu0 0.0
      %382 = vmatpush1.msra.mxu0 0.0
      %383 = vmatprep.subr.mxu0 0.0
      %384 = vmatpush1.msra.mxu0 0.0
      %385 = vmatprep.subr.mxu0 0.0
      %386 = vmatpush1.msra.mxu0 0.0
      %387 = vmatprep.subr.mxu0 0.0
      %388 = vmatpush1.msra.mxu0 0.0
      %389 = vmatprep.subr.mxu0 0.0
      %390 = vmatpush1.msra.mxu0 0.0
      %391 = vmatprep.subr.mxu0 0.0
      %392 = vmatpush1.msra.mxu0 0.0
      %393 = vmatprep.subr.mxu0 0.0
      %394 = vmatpush1.msra.mxu0 0.0
      %395 = vmatprep.subr.mxu0 0.0
      %396 = vmatpush1.msra.mxu0 0.0
      %397 = vmatprep.subr.mxu0 0.0
      %398 = vmatpush1.msra.mxu0 0.0
      %399 = vmatprep.subr.mxu0 0.0
      %400 = vmatpush1.msra.mxu0 0.0
      %401 = vmatprep.subr.mxu0 0.0
      %402 = vmatpush1.msra.mxu0 0.0
      %403 = vmatprep.subr.mxu0 0.0
      %404 = vmatpush1.msra.mxu0 0.0
      %405 = vmatprep.subr.mxu0 0.0
      %406 = vmatpush1.msra.mxu0 0.0
      %407 = vmatprep.subr.mxu0 0.0
      %408 = vmatpush1.msra.mxu0 0.0
      %409 = vmatprep.subr.mxu0 0.0
      %410 = vmatpush1.msra.mxu0 0.0
      %411 = vmatprep.subr.mxu0 0.0
      %412 = vmatpush1.msra.mxu0 0.0
      %413 = vmatprep.subr.mxu0 0.0
      %414 = vmatpush1.msra.mxu0 0.0
      %415 = vmatprep.subr.mxu0 0.0
      %416 = vmatpush1.msra.mxu0 0.0
      %417 = vmatprep.subr.mxu0 0.0
      %418 = vmatpush1.msra.mxu0 0.0
      %419 = vmatprep.subr.mxu0 0.0
      %420 = vmatpush1.msra.mxu0 0.0
      %421 = vmatprep.subr.mxu0 0.0
      %422 = vmatpush1.msra.mxu0 0.0
      %423 = vmatprep.subr.mxu0 0.0
      %424 = vmatpush1.msra.mxu0 0.0
      %425 = vmatprep.subr.mxu0 0.0
      %426 = vmatpush1.msra.mxu0 0.0
      %427 = vmatprep.mubr.f32.mxu0 0.0
      %428 = vmatmul.mubr.f32.gmra.mrb[0].mxu0 %v263
      %v429 = vpop.f32.mrb[0].mxu0
      %v430 = vadd.f32 %v244, %v429
      %v431 = vpop.f32.mrb[0].mxu0
      %v432 = vadd.f32 %v244, %v431
      %433 = vmatprep.mubr.f32.mxu0 0.0
      %434 = vmatmul.mubr.f32.gmra.mrb[0].mxu0 %v266
      %v435 = vpop.f32.mrb[0].mxu0
      %v436 = vadd.f32 %v249, %v435
      %v437 = vpop.f32.mrb[0].mxu0
      %v438 = vadd.f32 %v249, %v437
      %439 = vmatprep.mubr.f32.mxu0 0.0
      %440 = vmatmul.mubr.f32.gmra.mrb[0].mxu0 %v269
      %v441 = vpop.f32.mrb[0].mxu0
      %v442 = vadd.f32 %v254, %v441
      %v443 = vpop.f32.mrb[0].mxu0
      %v444 = vadd.f32 %v254, %v443
      %445 = vmatprep.mubr.f32.mxu0 0.0
      %446 = vmatmul.mubr.f32.gmra.mrb[0].mxu0 %v272
      %v447 = vpop.f32.mrb[0].mxu0
      %v448 = vadd.f32 %v259, %v447
      %v449 = vpop.f32.mrb[0].mxu0
      %v450 = vadd.f32 %v259, %v449
      %451 = vdwg.mxu0
      %452 = vmatprep.subr.mxu0 0.0
      %453 = vmatpush1.msra.mxu0 %v236
      %454 = vmatprep.subr.mxu0 0.0
      %455 = vmatpush1.msra.mxu0 0.0
      %456 = vmatprep.subr.mxu0 0.0
      %457 = vmatpush1.msra.mxu0 0.0
      %458 = vmatprep.subr.mxu0 0.0
      %459 = vmatpush1.msra.mxu0 0.0
      %460 = vmatprep.subr.mxu0 0.0
      %461 = vmatpush1.msra.mxu0 0.0
      %462 = vmatprep.subr.mxu0 0.0
      %463 = vmatpush1.msra.mxu0 0.0
      %464 = vmatprep.subr.mxu0 0.0
      %465 = vmatpush1.msra.mxu0 0.0
      %466 = vmatprep.subr.mxu0 0.0
      %467 = vmatpush1.msra.mxu0 0.0
      %468 = vmatprep.subr.mxu0 0.0
      %469 = vmatpush1.msra.mxu0 0.0
      %470 = vmatprep.subr.mxu0 0.0
      %471 = vmatpush1.msra.mxu0 0.0
      %472 = vmatprep.subr.mxu0 0.0
      %473 = vmatpush1.msra.mxu0 0.0
      %474 = vmatprep.subr.mxu0 0.0
      %475 = vmatpush1.msra.mxu0 0.0
      %476 = vmatprep.subr.mxu0 0.0
      %477 = vmatpush1.msra.mxu0 0.0
      %478 = vmatprep.subr.mxu0 0.0
      %479 = vmatpush1.msra.mxu0 0.0
      %480 = vmatprep.subr.mxu0 0.0
      %481 = vmatpush1.msra.mxu0 0.0
      %482 = vmatprep.subr.mxu0 0.0
      %483 = vmatpush1.msra.mxu0 0.0
      %484 = vmatprep.subr.mxu0 0.0
      %485 = vmatpush1.msra.mxu0 0.0
      %486 = vmatprep.subr.mxu0 0.0
      %487 = vmatpush1.msra.mxu0 0.0
      %488 = vmatprep.subr.mxu0 0.0
      %489 = vmatpush1.msra.mxu0 0.0
      %490 = vmatprep.subr.mxu0 0.0
      %491 = vmatpush1.msra.mxu0 0.0
      %492 = vmatprep.subr.mxu0 0.0
      %493 = vmatpush1.msra.mxu0 0.0
      %494 = vmatprep.subr.mxu0 0.0
      %495 = vmatpush1.msra.mxu0 0.0
      %496 = vmatprep.subr.mxu0 0.0
      %497 = vmatpush1.msra.mxu0 0.0
      %498 = vmatprep.subr.mxu0 0.0
      %499 = vmatpush1.msra.mxu0 0.0
      %500 = vmatprep.subr.mxu0 0.0
      %501 = vmatpush1.msra.mxu0 0.0
      %502 = vmatprep.subr.mxu0 0.0
      %503 = vmatpush1.msra.mxu0 0.0
      %504 = vmatprep.subr.mxu0 0.0
      %505 = vmatpush1.msra.mxu0 0.0
      %506 = vmatprep.subr.mxu0 0.0
      %507 = vmatpush1.msra.mxu0 0.0
      %508 = vmatprep.subr.mxu0 0.0
      %509 = vmatpush1.msra.mxu0 0.0
      %510 = vmatprep.subr.mxu0 0.0
      %511 = vmatpush1.msra.mxu0 0.0
      %512 = vmatprep.subr.mxu0 0.0
      %513 = vmatpush1.msra.mxu0 0.0
      %514 = vmatprep.subr.mxu0 0.0
      %515 = vmatpush1.msra.mxu0 0.0
      %516 = vmatprep.mubr.f32.mxu0 0.0
      %517 = vmatmul.mubr.f32.gmra.mrb[0].mxu0 %v263
      %v518 = vpop.f32.mrb[0].mxu0
      %v519 = vadd.f32 %v244, %v518
      %v520 = vpop.f32.mrb[0].mxu0
      %521 = vmatprep.mubr.f32.mxu0 0.0
      %522 = vmatmul.mubr.f32.gmra.mrb[0].mxu0 %v266
      %v523 = vpop.f32.mrb[0].mxu0
      %v524 = vadd.f32 %v249, %v523
      %v525 = vpop.f32.mrb[0].mxu0
      %526 = vmatprep.mubr.f32.mxu0 0.0
      %527 = vmatmul.mubr.f32.gmra.mrb[0].mxu0 %v269
      %v528 = vpop.f32.mrb[0].mxu0
      %v529 = vadd.f32 %v254, %v528
      %v530 = vpop.f32.mrb[0].mxu0
      %531 = vmatprep.mubr.f32.mxu0 0.0
      %532 = vmatmul.mubr.f32.gmra.mrb[0].mxu0 %v272
      %v533 = vpop.f32.mrb[0].mxu0
      %v534 = vadd.f32 %v259, %v533
      %v535 = vpop.f32.mrb[0].mxu0
      %536 = vdwg.mxu0
      %v537 = vmax.f32 %v341, 0.0
      %v538 = vmax.f32 %v343, 0.0
      %v539 = vmax.f32 %v430, 0.0
      %v540 = vmax.f32 %v432, 0.0
      %v541 = vmax.f32 %v519, 0.0
      %v542 = vmax.f32 %v347, 0.0
      %v543 = vmax.f32 %v349, 0.0
      %v544 = vmax.f32 %v436, 0.0
      %v545 = vmax.f32 %v438, 0.0
      %v546 = vmax.f32 %v524, 0.0
      %v547 = vmax.f32 %v353, 0.0
      %v548 = vmax.f32 %v355, 0.0
      %v549 = vmax.f32 %v442, 0.0
      %v550 = vmax.f32 %v444, 0.0
      %v551 = vmax.f32 %v529, 0.0
      %v552 = vmax.f32 %v359, 0.0
      %v553 = vmax.f32 %v361, 0.0
      %v554 = vmax.f32 %v448, 0.0
      %v555 = vmax.f32 %v450, 0.0
      %v556 = vmax.f32 %v534, 0.0
      %v557 = vld [vmem:[%s3] sm:$0xff]
      %v558 = vld [vmem:[%s4] sm:$0xff]
      %560 = vset.pattern.permute.xlu0 0
      %561 = vperm.xlu0 %560, %v558
      %v562 = vpop.permute.xlu0 %561
      %vm564 = vcmask 261120
      %v566 = vsel %vm564, %v557, 0
      %568 = vmatprep.subr.mxu0 %v538
      %569 = vmatpush1.msra.mxu0 %v537
      %570 = vmatprep.subr.mxu0 %v543
      %571 = vmatpush1.msra.mxu0 %v542
      %572 = vmatprep.subr.mxu0 %v548
      %573 = vmatpush1.msra.mxu0 %v547
      %574 = vmatprep.subr.mxu0 %v553
      %575 = vmatpush1.msra.mxu0 %v552
      %576 = vmatprep.subr.mxu0 0.0
      %577 = vmatpush1.msra.mxu0 0.0
      %578 = vmatprep.subr.mxu0 0.0
      %579 = vmatpush1.msra.mxu0 0.0
      %580 = vmatprep.subr.mxu0 0.0
      %581 = vmatpush1.msra.mxu0 0.0
      %582 = vmatprep.subr.mxu0 0.0
      %583 = vmatpush1.msra.mxu0 0.0
      %584 = vmatprep.subr.mxu0 0.0
      %585 = vmatpush1.msra.mxu0 0.0
      %586 = vmatprep.subr.mxu0 0.0
      %587 = vmatpush1.msra.mxu0 0.0
      %588 = vmatprep.subr.mxu0 0.0
      %589 = vmatpush1.msra.mxu0 0.0
      %590 = vmatprep.subr.mxu0 0.0
      %591 = vmatpush1.msra.mxu0 0.0
      %592 = vmatprep.subr.mxu0 0.0
      %593 = vmatpush1.msra.mxu0 0.0
      %594 = vmatprep.subr.mxu0 0.0
      %595 = vmatpush1.msra.mxu0 0.0
      %596 = vmatprep.subr.mxu0 0.0
      %597 = vmatpush1.msra.mxu0 0.0
      %598 = vmatprep.subr.mxu0 0.0
      %599 = vmatpush1.msra.mxu0 0.0
      %600 = vmatprep.subr.mxu0 0.0
      %601 = vmatpush1.msra.mxu0 0.0
      %602 = vmatprep.subr.mxu0 0.0
      %603 = vmatpush1.msra.mxu0 0.0
      %604 = vmatprep.subr.mxu0 0.0
      %605 = vmatpush1.msra.mxu0 0.0
      %606 = vmatprep.subr.mxu0 0.0
      %607 = vmatpush1.msra.mxu0 0.0
      %608 = vmatprep.subr.mxu0 0.0
      %609 = vmatpush1.msra.mxu0 0.0
      %610 = vmatprep.subr.mxu0 0.0
      %611 = vmatpush1.msra.mxu0 0.0
      %612 = vmatprep.subr.mxu0 0.0
      %613 = vmatpush1.msra.mxu0 0.0
      %614 = vmatprep.subr.mxu0 0.0
      %615 = vmatpush1.msra.mxu0 0.0
      %616 = vmatprep.subr.mxu0 0.0
      %617 = vmatpush1.msra.mxu0 0.0
      %618 = vmatprep.subr.mxu0 0.0
      %619 = vmatpush1.msra.mxu0 0.0
      %620 = vmatprep.subr.mxu0 0.0
      %621 = vmatpush1.msra.mxu0 0.0
      %622 = vmatprep.subr.mxu0 0.0
      %623 = vmatpush1.msra.mxu0 0.0
      %624 = vmatprep.subr.mxu0 0.0
      %625 = vmatpush1.msra.mxu0 0.0
      %626 = vmatprep.subr.mxu0 0.0
      %627 = vmatpush1.msra.mxu0 0.0
      %628 = vmatprep.subr.mxu0 0.0
      %629 = vmatpush1.msra.mxu0 0.0
      %630 = vmatprep.subr.mxu0 0.0
      %631 = vmatpush1.msra.mxu0 0.0
      %632 = vmatprep.mubr.f32.mxu0 0.0
      %633 = vmatmul.mubr.f32.gmra.mrb[0].mxu0 %v566
      %v634 = vpop.f32.mrb[0].mxu0
      %v635 = vadd.f32 %v562, %v634
      %v636 = vpop.f32.mrb[0].mxu0
      %v637 = vadd.f32 %v562, %v636
      %638 = vdwg.mxu0
      %639 = vmatprep.subr.mxu0 %v540
      %640 = vmatpush1.msra.mxu0 %v539
      %641 = vmatprep.subr.mxu0 %v545
      %642 = vmatpush1.msra.mxu0 %v544
      %643 = vmatprep.subr.mxu0 %v550
      %644 = vmatpush1.msra.mxu0 %v549
      %645 = vmatprep.subr.mxu0 %v555
      %646 = vmatpush1.msra.mxu0 %v554
      %647 = vmatprep.subr.mxu0 0.0
      %648 = vmatpush1.msra.mxu0 0.0
      %649 = vmatprep.subr.mxu0 0.0
      %650 = vmatpush1.msra.mxu0 0.0
      %651 = vmatprep.subr.mxu0 0.0
      %652 = vmatpush1.msra.mxu0 0.0
      %653 = vmatprep.subr.mxu0 0.0
      %654 = vmatpush1.msra.mxu0 0.0
      %655 = vmatprep.subr.mxu0 0.0
      %656 = vmatpush1.msra.mxu0 0.0
      %657 = vmatprep.subr.mxu0 0.0
      %658 = vmatpush1.msra.mxu0 0.0
      %659 = vmatprep.subr.mxu0 0.0
      %660 = vmatpush1.msra.mxu0 0.0
      %661 = vmatprep.subr.mxu0 0.0
      %662 = vmatpush1.msra.mxu0 0.0
      %663 = vmatprep.subr.mxu0 0.0
      %664 = vmatpush1.msra.mxu0 0.0
      %665 = vmatprep.subr.mxu0 0.0
      %666 = vmatpush1.msra.mxu0 0.0
      %667 = vmatprep.subr.mxu0 0.0
      %668 = vmatpush1.msra.mxu0 0.0
      %669 = vmatprep.subr.mxu0 0.0
      %670 = vmatpush1.msra.mxu0 0.0
      %671 = vmatprep.subr.mxu0 0.0
      %672 = vmatpush1.msra.mxu0 0.0
      %673 = vmatprep.subr.mxu0 0.0
      %674 = vmatpush1.msra.mxu0 0.0
      %675 = vmatprep.subr.mxu0 0.0
      %676 = vmatpush1.msra.mxu0 0.0
      %677 = vmatprep.subr.mxu0 0.0
      %678 = vmatpush1.msra.mxu0 0.0
      %679 = vmatprep.subr.mxu0 0.0
      %680 = vmatpush1.msra.mxu0 0.0
      %681 = vmatprep.subr.mxu0 0.0
      %682 = vmatpush1.msra.mxu0 0.0
      %683 = vmatprep.subr.mxu0 0.0
      %684 = vmatpush1.msra.mxu0 0.0
      %685 = vmatprep.subr.mxu0 0.0
      %686 = vmatpush1.msra.mxu0 0.0
      %687 = vmatprep.subr.mxu0 0.0
      %688 = vmatpush1.msra.mxu0 0.0
      %689 = vmatprep.subr.mxu0 0.0
      %690 = vmatpush1.msra.mxu0 0.0
      %691 = vmatprep.subr.mxu0 0.0
      %692 = vmatpush1.msra.mxu0 0.0
      %693 = vmatprep.subr.mxu0 0.0
      %694 = vmatpush1.msra.mxu0 0.0
      %695 = vmatprep.subr.mxu0 0.0
      %696 = vmatpush1.msra.mxu0 0.0
      %697 = vmatprep.subr.mxu0 0.0
      %698 = vmatpush1.msra.mxu0 0.0
      %699 = vmatprep.subr.mxu0 0.0
      %700 = vmatpush1.msra.mxu0 0.0
      %701 = vmatprep.subr.mxu0 0.0
      %702 = vmatpush1.msra.mxu0 0.0
      %703 = vmatprep.mubr.f32.mxu0 0.0
      %704 = vmatmul.mubr.f32.gmra.mrb[0].mxu0 %v566
      %v705 = vpop.f32.mrb[0].mxu0
      %v706 = vadd.f32 %v562, %v705
      %v707 = vpop.f32.mrb[0].mxu0
      %v708 = vadd.f32 %v562, %v707
      %709 = vdwg.mxu0
      %710 = vmatprep.subr.mxu0 0.0
      %711 = vmatpush1.msra.mxu0 %v541
      %712 = vmatprep.subr.mxu0 0.0
      %713 = vmatpush1.msra.mxu0 %v546
      %714 = vmatprep.subr.mxu0 0.0
      %715 = vmatpush1.msra.mxu0 %v551
      %716 = vmatprep.subr.mxu0 0.0
      %717 = vmatpush1.msra.mxu0 %v556
      %718 = vmatprep.subr.mxu0 0.0
      %719 = vmatpush1.msra.mxu0 0.0
      %720 = vmatprep.subr.mxu0 0.0
      %721 = vmatpush1.msra.mxu0 0.0
      %722 = vmatprep.subr.mxu0 0.0
      %723 = vmatpush1.msra.mxu0 0.0
      %724 = vmatprep.subr.mxu0 0.0
      %725 = vmatpush1.msra.mxu0 0.0
      %726 = vmatprep.subr.mxu0 0.0
      %727 = vmatpush1.msra.mxu0 0.0
      %728 = vmatprep.subr.mxu0 0.0
      %729 = vmatpush1.msra.mxu0 0.0
      %730 = vmatprep.subr.mxu0 0.0
      %731 = vmatpush1.msra.mxu0 0.0
      %732 = vmatprep.subr.mxu0 0.0
      %733 = vmatpush1.msra.mxu0 0.0
      %734 = vmatprep.subr.mxu0 0.0
      %735 = vmatpush1.msra.mxu0 0.0
      %736 = vmatprep.subr.mxu0 0.0
      %737 = vmatpush1.msra.mxu0 0.0
      %738 = vmatprep.subr.mxu0 0.0
      %739 = vmatpush1.msra.mxu0 0.0
      %740 = vmatprep.subr.mxu0 0.0
      %741 = vmatpush1.msra.mxu0 0.0
      %742 = vmatprep.subr.mxu0 0.0
      %743 = vmatpush1.msra.mxu0 0.0
      %744 = vmatprep.subr.mxu0 0.0
      %745 = vmatpush1.msra.mxu0 0.0
      %746 = vmatprep.subr.mxu0 0.0
      %747 = vmatpush1.msra.mxu0 0.0
      %748 = vmatprep.subr.mxu0 0.0
      %749 = vmatpush1.msra.mxu0 0.0
      %750 = vmatprep.subr.mxu0 0.0
      %751 = vmatpush1.msra.mxu0 0.0
      %752 = vmatprep.subr.mxu0 0.0
      %753 = vmatpush1.msra.mxu0 0.0
      %754 = vmatprep.subr.mxu0 0.0
      %755 = vmatpush1.msra.mxu0 0.0
      %756 = vmatprep.subr.mxu0 0.0
      %757 = vmatpush1.msra.mxu0 0.0
      %758 = vmatprep.subr.mxu0 0.0
      %759 = vmatpush1.msra.mxu0 0.0
      %760 = vmatprep.subr.mxu0 0.0
      %761 = vmatpush1.msra.mxu0 0.0
      %762 = vmatprep.subr.mxu0 0.0
      %763 = vmatpush1.msra.mxu0 0.0
      %764 = vmatprep.subr.mxu0 0.0
      %765 = vmatpush1.msra.mxu0 0.0
      %766 = vmatprep.subr.mxu0 0.0
      %767 = vmatpush1.msra.mxu0 0.0
      %768 = vmatprep.subr.mxu0 0.0
      %769 = vmatpush1.msra.mxu0 0.0
      %770 = vmatprep.subr.mxu0 0.0
      %771 = vmatpush1.msra.mxu0 0.0
      %772 = vmatprep.subr.mxu0 0.0
      %773 = vmatpush1.msra.mxu0 0.0
      %774 = vmatprep.mubr.f32.mxu0 0.0
      %775 = vmatmul.mubr.f32.gmra.mrb[0].mxu0 %v566
      %v776 = vpop.f32.mrb[0].mxu0
      %v777 = vadd.f32 %v562, %v776
      %v778 = vpop.f32.mrb[0].mxu0
      %779 = vdwg.mxu0
      %v780 = vmax.f32 %v635, -50000.0
      %v781 = vmax.f32 %v637, -50000.0
      %v782 = vmax.f32 %v706, -50000.0
      %v783 = vmax.f32 %v708, -50000.0
      %v784 = vmax.f32 %v777, -50000.0
      %v785 = vmin.f32 %v780, 50000.0
      %v786 = vmin.f32 %v781, 50000.0
      %v787 = vmin.f32 %v782, 50000.0
      %v788 = vmin.f32 %v783, 50000.0
      %v789 = vmin.f32 %v784, 50000.0
      %790 = vst [vmem:[%s226] sm:$0xff] %v785
      %791 = vst [vmem:[%s226 + $0x8] sm:$0xff] %v786
      %792 = vst [vmem:[%s226 + $0x10] sm:$0xff] %v787
      %793 = vst [vmem:[%s226 + $0x18] sm:$0xff] %v788
      %794 = vst [vmem:[%s226 + $0x20] sm:$0xff] %v789
      %s795 = smul.u32 5, %s16
      %p796 = scmp.lt.s32.totalorder %s795, 9
      %s797 = scalar_select %p796, %s795, 9
      %s798 = smul.addr %s797, 8
      %s799 = scalar_lea.vmem %s5, %s798
      // Predicated region
      $region41: #{test_align_forward.3} parent=39 // pred_check
        %p800 = pneg %p144
      $region42: #{test_align_forward.3} parent=39 // pred_check_branch
        %802 = sbr.rel (%p800) target = $region44
      $region43: #{test_align_forward.3} parent=39 // pred_region
        %s803 = smul.u32 5, %s16
      $region44: #{test_align_forward.3} parent=39 // pred_fallthru
        _
    $region40: #{test_align_forward.3} parent=5 // pred_fallthru
      _
    %p804 = scmp.le.s32.totalorder 2, %s11
    // Predicated region
    $region45: #{test_align_forward.3} parent=5 // pred_check
      %p805 = pneg %p804
    $region46: #{test_align_forward.3} parent=5 // pred_check_branch
      %807 = sbr.rel (%p805) target = $region48
    $region47: #{test_align_forward.3} parent=5 // pred_region
      %s808 = ssub.s32 %s11, 2
      // Predicated region
      $region49: #{test_align_forward.3} parent=47 // pred_check
        %p809 = pneg %p150
      $region50: #{test_align_forward.3} parent=47 // pred_check_branch
        %811 = sbr.rel (%p809) target = $region52
      $region51: #{test_align_forward.3} parent=47 // pred_region
        %s812 = smul.u32 5, %s17
        %p813 = scmp.lt.s32.totalorder %s812, 9
        %s814 = scalar_select %p813, %s812, 9
        %s815 = smul.addr %s814, 8
        %s816 = scalar_lea.vmem %s5, %s815
      $region52: #{test_align_forward.3} parent=47 // pred_fallthru
        _
    $region48: #{test_align_forward.3} parent=5 // pred_fallthru
      _
  $region6: #{test_align_forward.3} parent=0 // loop_footer
    %s15 = sadd.s32 1, %s11
  $region7: #{test_align_forward.3} parent=0 // loop_footer_branch
    %10 = sbr.rel target = $region3
  $region8: #{test_align_forward.3} parent=0 // loop_exit
    _

// kernel: test_align_forward.2
$region0: #{test_align_forward.2}
  #allocation0 [shape = 'u32[]', space=smem, size = 0x4, offset = 0x4, fixed_abs, tag = 'smem constant byte address 0x4 - core index']
  #allocation1 [shape = 'u32[144,128]{1,0:T(1,128)}', space=vmem, size = 0x12000, scoped, tag = 'internal scratch']
  #allocation2 [shape = 'f32[1,1]{1,0:T(1,128)S(1)}', space=vmem, size = 0x200, scoped, tag = 'scoped memory for test_align_forward.2']
  #allocation3 [shape = 'f32[1,1]{1,0:T(1,128)S(1)}', space=vmem, size = 0x200, scoped, tag = 'scoped memory for test_align_forward.2']
  %s0 = inlined_call_operand.hbm [shape: f32[8,1024], index: 0, kind: input, shape index: {}]
  %s1 = inlined_call_operand.hbm [shape: f32[1024,256], index: 1, kind: input, shape index: {}]
  %s2 = inlined_call_operand.vmem [shape: f32[1,256], index: 2, kind: input, shape index: {}]
  %s3 = inlined_call_operand.hbm [shape: f32[32,256], index: 3, kind: input, shape index: {}]
  %s4 = inlined_call_operand.vmem [shape: f32[1,256], index: 4, kind: input, shape index: {}]
  %s5 = inlined_call_operand.vmem [shape: f32[1,1024], index: 5, kind: input, shape index: {}]
  %s6 = inlined_call_operand.<no memory space> [shape: f32[1,1], index: 6, kind: input, shape index: {}]
  %s7 = inlined_call_operand.<no memory space> [shape: f32[1,1], index: 7, kind: input, shape index: {}]
  %s8 = inlined_call_operand.vmem [shape: f32[8,32], index: 8, kind: output, shape index: {0}]
  %s9 = inlined_call_operand.vmem [shape: f32[8,1], index: 9, kind: output, shape index: {1}]
  %10 = xla_tuple %s8, %s9
  %s11 = sld [smem:[#allocation0]]
  $region62: #{test_align_forward.2} parent=0
    _
  %s13 = ssub.s32 1, %s11
  %s14 = scalar_select 0, %s13, %s11
  %v15 = vstv %s6
  %16 = vst [vmem:[#allocation2] sm:$0x1] %v15
  %v17 = vstv %s7
  %18 = vst [vmem:[#allocation3] sm:$0x1] %v17
  $region1: #{test_align_forward.2} parent=0
    #allocation4 [shape = 'u8[32768]{0}', space=vmem, size = 0x8000, scoped, tag = 'input window, operand 0, single buffered']
    #allocation5 [shape = 's32[1]{0}', space=sflag, size = 0x4, scoped, tag = 'scoped memory for test_align_forward.2']
    #allocation6 [shape = 'u8[1048576]{0}', space=vmem, size = 0x100000, scoped, tag = 'input window, operand 1, single buffered']
    #allocation7 [shape = 's32[1]{0}', space=sflag, size = 0x4, scoped, tag = 'scoped memory for test_align_forward.2']
    #allocation8 [shape = 'u8[32768]{0}', space=vmem, size = 0x8000, scoped, tag = 'input window, operand 3, single buffered']
    %19 = vsyncpa [#allocation5], 0
    %20 = vsyncpa [#allocation7], 0
    // Predicated region
    $region2: #{test_align_forward.2} parent=1 // pred_check
      _
    $region3: #{test_align_forward.2} parent=1 // pred_check_branch
      %22 = sbr.rel (0) target = $region5
    $region4: #{test_align_forward.2} parent=1 // pred_region
      %s24 = ssub.s32 1024, 1024
      %25 = vsyncadd [#allocation5], %s24
      %s27 = sshll.u32 [#allocation4], 4
      %s28 = int_to_ptr.vmem [resolvable:$true] %s27
      %30 = dma.hbm_to_vmem [thread:$0]  %s0, 1024, %s28, [#allocation5]
    $region5: #{test_align_forward.2} parent=1 // pred_fallthru
      _
    // Predicated region
    $region6: #{test_align_forward.2} parent=1 // pred_check
      _
    $region7: #{test_align_forward.2} parent=1 // pred_check_branch
      %32 = sbr.rel (0) target = $region9
    $region8: #{test_align_forward.2} parent=1 // pred_region
      %s34 = ssub.s32 32768, 32768
      %35 = vsyncadd [#allocation7], %s34
      %s36 = sshll.u32 [#allocation6], 4
      %s37 = int_to_ptr.vmem [resolvable:$true] %s36
      %42 = dma.hbm_to_vmem [thread:$0]  %s1, 32768, %s37, [#allocation7], 256, 256, 16
    $region9: #{test_align_forward.2} parent=1 // pred_fallthru
      _
    // Predicated region
    $region10: #{test_align_forward.2} parent=1 // pred_check
      _
    $region11: #{test_align_forward.2} parent=1 // pred_check_branch
      %44 = sbr.rel (0) target = $region13
    $region12: #{test_align_forward.2} parent=1 // pred_region
      _
    $region13: #{test_align_forward.2} parent=1 // pred_fallthru
      _
    // Predicated region
    $region14: #{test_align_forward.2} parent=1 // pred_check
      _
    $region15: #{test_align_forward.2} parent=1 // pred_check_branch
      %46 = sbr.rel (0) target = $region17
    $region16: #{test_align_forward.2} parent=1 // pred_region
      %s48 = ssub.s32 1024, 1024
      %49 = vsyncadd [#allocation7], %s48
      %s50 = sshll.u32 [#allocation8], 4
      %s51 = int_to_ptr.vmem [resolvable:$true] %s50
      %56 = dma.hbm_to_vmem [thread:$0]  %s3, 1024, %s51, [#allocation7], 256, 256, 16
    $region17: #{test_align_forward.2} parent=1 // pred_fallthru
      _
    // Predicated region
    $region18: #{test_align_forward.2} parent=1 // pred_check
      _
    $region19: #{test_align_forward.2} parent=1 // pred_check_branch
      %58 = sbr.rel (0) target = $region21
    $region20: #{test_align_forward.2} parent=1 // pred_region
      _
    $region21: #{test_align_forward.2} parent=1 // pred_fallthru
      _
    // Predicated region
    $region22: #{test_align_forward.2} parent=1 // pred_check
      _
    $region23: #{test_align_forward.2} parent=1 // pred_check_branch
      %60 = sbr.rel (0) target = $region25
    $region24: #{test_align_forward.2} parent=1 // pred_region
      _
    $region25: #{test_align_forward.2} parent=1 // pred_fallthru
      _
    // Predicated region
    $region26: #{test_align_forward.2} parent=1 // pred_check
      _
    $region27: #{test_align_forward.2} parent=1 // pred_check_branch
      %62 = sbr.rel (0) target = $region29
    $region28: #{test_align_forward.2} parent=1 // pred_region
      _
    $region29: #{test_align_forward.2} parent=1 // pred_fallthru
      _
    // Predicated region
    $region30: #{test_align_forward.2} parent=1 // pred_check
      _
    $region31: #{test_align_forward.2} parent=1 // pred_check_branch
      %64 = sbr.rel (0) target = $region33
    $region32: #{test_align_forward.2} parent=1 // pred_region
      _
    $region33: #{test_align_forward.2} parent=1 // pred_fallthru
      _
    // Predicated region
    $region34: #{test_align_forward.2} parent=1 // pred_check
      _
    $region35: #{test_align_forward.2} parent=1 // pred_check_branch
      %66 = sbr.rel (0) target = $region37
    $region36: #{test_align_forward.2} parent=1 // pred_region
      %67 = dma.done [#allocation5], 1024
    $region37: #{test_align_forward.2} parent=1 // pred_fallthru
      _
    // Predicated region
    $region38: #{test_align_forward.2} parent=1 // pred_check
      _
    $region39: #{test_align_forward.2} parent=1 // pred_check_branch
      %69 = sbr.rel (0) target = $region41
    $region40: #{test_align_forward.2} parent=1 // pred_region
      %70 = dma.done [#allocation7], 32768
    $region41: #{test_align_forward.2} parent=1 // pred_fallthru
      _
    // Predicated region
    $region42: #{test_align_forward.2} parent=1 // pred_check
      _
    $region43: #{test_align_forward.2} parent=1 // pred_check_branch
      %72 = sbr.rel (0) target = $region45
    $region44: #{test_align_forward.2} parent=1 // pred_region
      %73 = dma.done [#allocation7], 1024
    $region45: #{test_align_forward.2} parent=1 // pred_fallthru
      _
    %v74 = vld [vmem:[#allocation4] sm:$0xff]
    %v75 = vld [vmem:[#allocation4 + $0x8] sm:$0xff]
    %v76 = vld [vmem:[#allocation4 + $0x10] sm:$0xff]
    %v77 = vld [vmem:[#allocation4 + $0x18] sm:$0xff]
    %v78 = vld [vmem:[#allocation4 + $0x20] sm:$0xff]
    %v79 = vld [vmem:[#allocation4 + $0x28] sm:$0xff]
    %v80 = vld [vmem:[#allocation4 + $0x30] sm:$0xff]
    %v81 = vld [vmem:[#allocation4 + $0x38] sm:$0xff]
    %v82 = vmul.f32 %v74, %v74
    %v83 = vmul.f32 %v75, %v75
    %v84 = vmul.f32 %v76, %v76
    %v85 = vmul.f32 %v77, %v77
    %v86 = vmul.f32 %v78, %v78
    %v87 = vmul.f32 %v79, %v79
    %v88 = vmul.f32 %v80, %v80
    %v89 = vmul.f32 %v81, %v81
    %v90 = vadd.f32 %v82, %v83
    %v91 = vadd.f32 %v90, %v84
    %v92 = vadd.f32 %v91, %v85
    %v93 = vadd.f32 %v92, %v86
    %v94 = vadd.f32 %v93, %v87
    %v95 = vadd.f32 %v94, %v88
    %v96 = vadd.f32 %v95, %v89
    %97 = vadd.xlane.f32.xlu0 %v96
    %v98 = vpop.xlane.xlu0 %97
    %v99 = vrsqrt.pop %v98
    %v100 = vmul.f32 %v98, %v99
    %vm101 = vcmp.eq.f32.partialorder %v98, inf
    %v102 = vsel %vm101, %v98, %v100
    %vm103 = vcmp.eq.f32.partialorder %v98, 0.0
    %v104 = vand.u32 %v98, 2147483648
    %v105 = vsel %vm103, %v104, %v102
    %v106 = vmax.f32 %v105, 1e-12
    %v107 = vrcp.pop %v106
    %v108 = vmul.f32 %v74, %v107
    %v109 = vmul.f32 %v75, %v107
    %v110 = vmul.f32 %v76, %v107
    %v111 = vmul.f32 %v77, %v107
    %v112 = vmul.f32 %v78, %v107
    %v113 = vmul.f32 %v79, %v107
    %v114 = vmul.f32 %v80, %v107
    %v115 = vmul.f32 %v81, %v107
    %v116 = vmul.f32 %v108, 0.5
    %v117 = vmul.f32 %v109, 0.5
    %v118 = vmul.f32 %v110, 0.5
    %v119 = vmul.f32 %v111, 0.5
    %v120 = vmul.f32 %v112, 0.5
    %v121 = vmul.f32 %v113, 0.5
    %v122 = vmul.f32 %v114, 0.5
    %v123 = vmul.f32 %v115, 0.5
    %v124 = vld [vmem:[#allocation6] sm:$0xff]
    %v125 = vld [vmem:[#allocation6 + $0x8] sm:$0xff]
    %v126 = vld [vmem:[#allocation6 + $0x10] sm:$0xff]
    %v127 = vld [vmem:[#allocation6 + $0x18] sm:$0xff]
    %v128 = vld [vmem:[#allocation6 + $0x20] sm:$0xff]
    %v129 = vld [vmem:[#allocation6 + $0x28] sm:$0xff]
    %v130 = vld [vmem:[#allocation6 + $0x30] sm:$0xff]
    %v131 = vld [vmem:[#allocation6 + $0x38] sm:$0xff]
    %v132 = vld [vmem:[#allocation6 + $0x40] sm:$0xff]
    %v133 = vld [vmem:[#allocation6 + $0x48] sm:$0xff]
    %v134 = vld [vmem:[#allocation6 + $0x50] sm:$0xff]
    %v135 = vld [vmem:[#allocation6 + $0x58] sm:$0xff]
    %v136 = vld [vmem:[#allocation6 + $0x60] sm:$0xff]
    %v137 = vld [vmem:[#allocation6 + $0x68] sm:$0xff]
    %v138 = vld [vmem:[#allocation6 + $0x70] sm:$0xff]
    %v139 = vld [vmem:[#allocation6 + $0x78] sm:$0xff]
    %v140 = vld [vmem:[#allocation6 + $0x80] sm:$0xff]
    %v141 = vld [vmem:[#allocation6 + $0x88] sm:$0xff]
    %v142 = vld [vmem:[#allocation6 + $0x90] sm:$0xff]
    %v143 = vld [vmem:[#allocation6 + $0x98] sm:$0xff]
    %v144 = vld [vmem:[#allocation6 + $0xa0] sm:$0xff]
    %v145 = vld [vmem:[#allocation6 + $0xa8] sm:$0xff]
    %v146 = vld [vmem:[#allocation6 + $0xb0] sm:$0xff]
    %v147 = vld [vmem:[#allocation6 + $0xb8] sm:$0xff]
    %v148 = vld [vmem:[#allocation6 + $0xc0] sm:$0xff]
    %v149 = vld [vmem:[#allocation6 + $0xc8] sm:$0xff]
    %v150 = vld [vmem:[#allocation6 + $0xd0] sm:$0xff]
    %v151 = vld [vmem:[#allocation6 + $0xd8] sm:$0xff]
    %v152 = vld [vmem:[#allocation6 + $0xe0] sm:$0xff]
    %v153 = vld [vmem:[#allocation6 + $0xe8] sm:$0xff]
    %v154 = vld [vmem:[#allocation6 + $0xf0] sm:$0xff]
    %v155 = vld [vmem:[#allocation6 + $0xf8] sm:$0xff]
    %v156 = vld [vmem:[#allocation6 + $0x100] sm:$0xff]
    %v157 = vld [vmem:[#allocation6 + $0x108] sm:$0xff]
    %v158 = vld [vmem:[#allocation6 + $0x110] sm:$0xff]
    %v159 = vld [vmem:[#allocation6 + $0x118] sm:$0xff]
    %v160 = vld [vmem:[#allocation6 + $0x120] sm:$0xff]
    %v161 = vld [vmem:[#allocation6 + $0x128] sm:$0xff]
    %v162 = vld [vmem:[#allocation6 + $0x130] sm:$0xff]
    %v163 = vld [vmem:[#allocation6 + $0x138] sm:$0xff]
    %v164 = vld [vmem:[#allocation6 + $0x140] sm:$0xff]
    %v165 = vld [vmem:[#allocation6 + $0x148] sm:$0xff]
    %v166 = vld [vmem:[#allocation6 + $0x150] sm:$0xff]
    %v167 = vld [vmem:[#allocation6 + $0x158] sm:$0xff]
    %v168 = vld [vmem:[#allocation6 + $0x160] sm:$0xff]
    %v169 = vld [vmem:[#allocation6 + $0x168] sm:$0xff]
    %v170 = vld [vmem:[#allocation6 + $0x170] sm:$0xff]
    %v171 = vld [vmem:[#allocation6 + $0x178] sm:$0xff]
    %v172 = vld [vmem:[#allocation6 + $0x180] sm:$0xff]
    %v173 = vld [vmem:[#allocation6 + $0x188] sm:$0xff]
    %v174 = vld [vmem:[#allocation6 + $0x190] sm:$0xff]
    %v175 = vld [vmem:[#allocation6 + $0x198] sm:$0xff]
    %v176 = vld [vmem:[#allocation6 + $0x1a0] sm:$0xff]
    %v177 = vld [vmem:[#allocation6 + $0x1a8] sm:$0xff]
    %v178 = vld [vmem:[#allocation6 + $0x1b0] sm:$0xff]
    %v179 = vld [vmem:[#allocation6 + $0x1b8] sm:$0xff]
    %v180 = vld [vmem:[#allocation6 + $0x1c0] sm:$0xff]
    %v181 = vld [vmem:[#allocation6 + $0x1c8] sm:$0xff]
    %v182 = vld [vmem:[#allocation6 + $0x1d0] sm:$0xff]
    %v183 = vld [vmem:[#allocation6 + $0x1d8] sm:$0xff]
    %v184 = vld [vmem:[#allocation6 + $0x1e0] sm:$0xff]
    %v185 = vld [vmem:[#allocation6 + $0x1e8] sm:$0xff]
    %v186 = vld [vmem:[#allocation6 + $0x1f0] sm:$0xff]
    %v187 = vld [vmem:[#allocation6 + $0x1f8] sm:$0xff]
    %v188 = vld [vmem:[#allocation6 + $0x200] sm:$0xff]
    %v189 = vld [vmem:[#allocation6 + $0x208] sm:$0xff]
    %v190 = vld [vmem:[#allocation6 + $0x210] sm:$0xff]
    %v191 = vld [vmem:[#allocation6 + $0x218] sm:$0xff]
    %v192 = vld [vmem:[#allocation6 + $0x220] sm:$0xff]
    %v193 = vld [vmem:[#allocation6 + $0x228] sm:$0xff]
    %v194 = vld [vmem:[#allocation6 + $0x230] sm:$0xff]
    %v195 = vld [vmem:[#allocation6 + $0x238] sm:$0xff]
    %v196 = vld [vmem:[#allocation6 + $0x240] sm:$0xff]
    %v197 = vld [vmem:[#allocation6 + $0x248] sm:$0xff]
    %v198 = vld [vmem:[#allocation6 + $0x250] sm:$0xff]
    %v199 = vld [vmem:[#allocation6 + $0x258] sm:$0xff]
    %v200 = vld [vmem:[#allocation6 + $0x260] sm:$0xff]
    %v201 = vld [vmem:[#allocation6 + $0x268] sm:$0xff]
    %v202 = vld [vmem:[#allocation6 + $0x270] sm:$0xff]
    %v203 = vld [vmem:[#allocation6 + $0x278] sm:$0xff]
    %v204 = vld [vmem:[#allocation6 + $0x280] sm:$0xff]
    %v205 = vld [vmem:[#allocation6 + $0x288] sm:$0xff]
    %v206 = vld [vmem:[#allocation6 + $0x290] sm:$0xff]
    %v207 = vld [vmem:[#allocation6 + $0x298] sm:$0xff]
    %v208 = vld [vmem:[#allocation6 + $0x2a0] sm:$0xff]
    %v209 = vld [vmem:[#allocation6 + $0x2a8] sm:$0xff]
    %v210 = vld [vmem:[#allocation6 + $0x2b0] sm:$0xff]
    %v211 = vld [vmem:[#allocation6 + $0x2b8] sm:$0xff]
    %v212 = vld [vmem:[#allocation6 + $0x2c0] sm:$0xff]
    %v213 = vld [vmem:[#allocation6 + $0x2c8] sm:$0xff]
    %v214 = vld [vmem:[#allocation6 + $0x2d0] sm:$0xff]
    %v215 = vld [vmem:[#allocation6 + $0x2d8] sm:$0xff]
    %v216 = vld [vmem:[#allocation6 + $0x2e0] sm:$0xff]
    %v217 = vld [vmem:[#allocation6 + $0x2e8] sm:$0xff]
    %v218 = vld [vmem:[#allocation6 + $0x2f0] sm:$0xff]
    %v219 = vld [vmem:[#allocation6 + $0x2f8] sm:$0xff]
    %v220 = vld [vmem:[#allocation6 + $0x300] sm:$0xff]
    %v221 = vld [vmem:[#allocation6 + $0x308] sm:$0xff]
    %v222 = vld [vmem:[#allocation6 + $0x310] sm:$0xff]
    %v223 = vld [vmem:[#allocation6 + $0x318] sm:$0xff]
    %v224 = vld [vmem:[#allocation6 + $0x320] sm:$0xff]
    %v225 = vld [vmem:[#allocation6 + $0x328] sm:$0xff]
    %v226 = vld [vmem:[#allocation6 + $0x330] sm:$0xff]
    %v227 = vld [vmem:[#allocation6 + $0x338] sm:$0xff]
    %v228 = vld [vmem:[#allocation6 + $0x340] sm:$0xff]
    %v229 = vld [vmem:[#allocation6 + $0x348] sm:$0xff]
    %v230 = vld [vmem:[#allocation6 + $0x350] sm:$0xff]
    %v231 = vld [vmem:[#allocation6 + $0x358] sm:$0xff]
    %v232 = vld [vmem:[#allocation6 + $0x360] sm:$0xff]
    %v233 = vld [vmem:[#allocation6 + $0x368] sm:$0xff]
    %v234 = vld [vmem:[#allocation6 + $0x370] sm:$0xff]
    %v235 = vld [vmem:[#allocation6 + $0x378] sm:$0xff]
    %v236 = vld [vmem:[#allocation6 + $0x380] sm:$0xff]
    %v237 = vld [vmem:[#allocation6 + $0x388] sm:$0xff]
    %v238 = vld [vmem:[#allocation6 + $0x390] sm:$0xff]
    %v239 = vld [vmem:[#allocation6 + $0x398] sm:$0xff]
    %v240 = vld [vmem:[#allocation6 + $0x3a0] sm:$0xff]
    %v241 = vld [vmem:[#allocation6 + $0x3a8] sm:$0xff]
    %v242 = vld [vmem:[#allocation6 + $0x3b0] sm:$0xff]
    %v243 = vld [vmem:[#allocation6 + $0x3b8] sm:$0xff]
    %v244 = vld [vmem:[#allocation6 + $0x3c0] sm:$0xff]
    %v245 = vld [vmem:[#allocation6 + $0x3c8] sm:$0xff]
    %v246 = vld [vmem:[#allocation6 + $0x3d0] sm:$0xff]
    %v247 = vld [vmem:[#allocation6 + $0x3d8] sm:$0xff]
    %v248 = vld [vmem:[#allocation6 + $0x3e0] sm:$0xff]
    %v249 = vld [vmem:[#allocation6 + $0x3e8] sm:$0xff]
    %v250 = vld [vmem:[#allocation6 + $0x3f0] sm:$0xff]
    %v251 = vld [vmem:[#allocation6 + $0x3f8] sm:$0xff]
    %v252 = vld [vmem:[#allocation6 + $0x400] sm:$0xff]
    %v253 = vld [vmem:[#allocation6 + $0x408] sm:$0xff]
    %v254 = vld [vmem:[#allocation6 + $0x410] sm:$0xff]
    %v255 = vld [vmem:[#allocation6 + $0x418] sm:$0xff]
    %v256 = vld [vmem:[#allocation6 + $0x420] sm:$0xff]
    %v257 = vld [vmem:[#allocation6 + $0x428] sm:$0xff]
    %v258 = vld [vmem:[#allocation6 + $0x430] sm:$0xff]
    %v259 = vld [vmem:[#allocation6 + $0x438] sm:$0xff]
    %v260 = vld [vmem:[#allocation6 + $0x440] sm:$0xff]
    %v261 = vld [vmem:[#allocation6 + $0x448] sm:$0xff]
    %v262 = vld [vmem:[#allocation6 + $0x450] sm:$0xff]
    %v263 = vld [vmem:[#allocation6 + $0x458] sm:$0xff]
    %v264 = vld [vmem:[#allocation6 + $0x460] sm:$0xff]
    %v265 = vld [vmem:[#allocation6 + $0x468] sm:$0xff]
    %v266 = vld [vmem:[#allocation6 + $0x470] sm:$0xff]
    %v267 = vld [vmem:[#allocation6 + $0x478] sm:$0xff]
    %v268 = vld [vmem:[#allocation6 + $0x480] sm:$0xff]
    %v269 = vld [vmem:[#allocation6 + $0x488] sm:$0xff]
    %v270 = vld [vmem:[#allocation6 + $0x490] sm:$0xff]
    %v271 = vld [vmem:[#allocation6 + $0x498] sm:$0xff]
    %v272 = vld [vmem:[#allocation6 + $0x4a0] sm:$0xff]
    %v273 = vld [vmem:[#allocation6 + $0x4a8] sm:$0xff]
    %v274 = vld [vmem:[#allocation6 + $0x4b0] sm:$0xff]
    %v275 = vld [vmem:[#allocation6 + $0x4b8] sm:$0xff]
    %v276 = vld [vmem:[#allocation6 + $0x4c0] sm:$0xff]
    %v277 = vld [vmem:[#allocation6 + $0x4c8] sm:$0xff]
    %v278 = vld [vmem:[#allocation6 + $0x4d0] sm:$0xff]
    %v279 = vld [vmem:[#allocation6 + $0x4d8] sm:$0xff]
    %v280 = vld [vmem:[#allocation6 + $0x4e0] sm:$0xff]
    %v281 = vld [vmem:[#allocation6 + $0x4e8] sm:$0xff]
    %v282 = vld [vmem:[#allocation6 + $0x4f0] sm:$0xff]
    %v283 = vld [vmem:[#allocation6 + $0x4f8] sm:$0xff]
    %v284 = vld [vmem:[#allocation6 + $0x500] sm:$0xff]
    %v285 = vld [vmem:[#allocation6 + $0x508] sm:$0xff]
    %v286 = vld [vmem:[#allocation6 + $0x510] sm:$0xff]
    %v287 = vld [vmem:[#allocation6 + $0x518] sm:$0xff]
    %v288 = vld [vmem:[#allocation6 + $0x520] sm:$0xff]
    %v289 = vld [vmem:[#allocation6 + $0x528] sm:$0xff]
    %v290 = vld [vmem:[#allocation6 + $0x530] sm:$0xff]
    %v291 = vld [vmem:[#allocation6 + $0x538] sm:$0xff]
    %v292 = vld [vmem:[#allocation6 + $0x540] sm:$0xff]
    %v293 = vld [vmem:[#allocation6 + $0x548] sm:$0xff]
    %v294 = vld [vmem:[#allocation6 + $0x550] sm:$0xff]
    %v295 = vld [vmem:[#allocation6 + $0x558] sm:$0xff]
    %v296 = vld [vmem:[#allocation6 + $0x560] sm:$0xff]
    %v297 = vld [vmem:[#allocation6 + $0x568] sm:$0xff]
    %v298 = vld [vmem:[#allocation6 + $0x570] sm:$0xff]
    %v299 = vld [vmem:[#allocation6 + $0x578] sm:$0xff]
    %v300 = vld [vmem:[#allocation6 + $0x580] sm:$0xff]
    %v301 = vld [vmem:[#allocation6 + $0x588] sm:$0xff]
    %v302 = vld [vmem:[#allocation6 + $0x590] sm:$0xff]
    %v303 = vld [vmem:[#allocation6 + $0x598] sm:$0xff]
    %v304 = vld [vmem:[#allocation6 + $0x5a0] sm:$0xff]
    %v305 = vld [vmem:[#allocation6 + $0x5a8] sm:$0xff]
    %v306 = vld [vmem:[#allocation6 + $0x5b0] sm:$0xff]
    %v307 = vld [vmem:[#allocation6 + $0x5b8] sm:$0xff]
    %v308 = vld [vmem:[#allocation6 + $0x5c0] sm:$0xff]
    %v309 = vld [vmem:[#allocation6 + $0x5c8] sm:$0xff]
    %v310 = vld [vmem:[#allocation6 + $0x5d0] sm:$0xff]
    %v311 = vld [vmem:[#allocation6 + $0x5d8] sm:$0xff]
    %v312 = vld [vmem:[#allocation6 + $0x5e0] sm:$0xff]
    %v313 = vld [vmem:[#allocation6 + $0x5e8] sm:$0xff]
    %v314 = vld [vmem:[#allocation6 + $0x5f0] sm:$0xff]
    %v315 = vld [vmem:[#allocation6 + $0x5f8] sm:$0xff]
    %v316 = vld [vmem:[#allocation6 + $0x600] sm:$0xff]
    %v317 = vld [vmem:[#allocation6 + $0x608] sm:$0xff]
    %v318 = vld [vmem:[#allocation6 + $0x610] sm:$0xff]
    %v319 = vld [vmem:[#allocation6 + $0x618] sm:$0xff]
    %v320 = vld [vmem:[#allocation6 + $0x620] sm:$0xff]
    %v321 = vld [vmem:[#allocation6 + $0x628] sm:$0xff]
    %v322 = vld [vmem:[#allocation6 + $0x630] sm:$0xff]
    %v323 = vld [vmem:[#allocation6 + $0x638] sm:$0xff]
    %v324 = vld [vmem:[#allocation6 + $0x640] sm:$0xff]
    %v325 = vld [vmem:[#allocation6 + $0x648] sm:$0xff]
    %v326 = vld [vmem:[#allocation6 + $0x650] sm:$0xff]
    %v327 = vld [vmem:[#allocation6 + $0x658] sm:$0xff]
    %v328 = vld [vmem:[#allocation6 + $0x660] sm:$0xff]
    %v329 = vld [vmem:[#allocation6 + $0x668] sm:$0xff]
    %v330 = vld [vmem:[#allocation6 + $0x670] sm:$0xff]
    %v331 = vld [vmem:[#allocation6 + $0x678] sm:$0xff]
    %v332 = vld [vmem:[#allocation6 + $0x680] sm:$0xff]
    %v333 = vld [vmem:[#allocation6 + $0x688] sm:$0xff]
    %v334 = vld [vmem:[#allocation6 + $0x690] sm:$0xff]
    %v335 = vld [vmem:[#allocation6 + $0x698] sm:$0xff]
    %v336 = vld [vmem:[#allocation6 + $0x6a0] sm:$0xff]
    %v337 = vld [vmem:[#allocation6 + $0x6a8] sm:$0xff]
    %v338 = vld [vmem:[#allocation6 + $0x6b0] sm:$0xff]
    %v339 = vld [vmem:[#allocation6 + $0x6b8] sm:$0xff]
    %v340 = vld [vmem:[#allocation6 + $0x6c0] sm:$0xff]
    %v341 = vld [vmem:[#allocation6 + $0x6c8] sm:$0xff]
    %v342 = vld [vmem:[#allocation6 + $0x6d0] sm:$0xff]
    %v343 = vld [vmem:[#allocation6 + $0x6d8] sm:$0xff]
    %v344 = vld [vmem:[#allocation6 + $0x6e0] sm:$0xff]
    %v345 = vld [vmem:[#allocation6 + $0x6e8] sm:$0xff]
    %v346 = vld [vmem:[#allocation6 + $0x6f0] sm:$0xff]
    %v347 = vld [vmem:[#allocation6 + $0x6f8] sm:$0xff]
    %v348 = vld [vmem:[#allocation6 + $0x700] sm:$0xff]
    %v349 = vld [vmem:[#allocation6 + $0x708] sm:$0xff]
    %v350 = vld [vmem:[#allocation6 + $0x710] sm:$0xff]
    %v351 = vld [vmem:[#allocation6 + $0x718] sm:$0xff]
    %v352 = vld [vmem:[#allocation6 + $0x720] sm:$0xff]
    %v353 = vld [vmem:[#allocation6 + $0x728] sm:$0xff]
    %v354 = vld [vmem:[#allocation6 + $0x730] sm:$0xff]
    %v355 = vld [vmem:[#allocation6 + $0x738] sm:$0xff]
    %v356 = vld [vmem:[#allocation6 + $0x740] sm:$0xff]
    %v357 = vld [vmem:[#allocation6 + $0x748] sm:$0xff]
    %v358 = vld [vmem:[#allocation6 + $0x750] sm:$0xff]
    %v359 = vld [vmem:[#allocation6 + $0x758] sm:$0xff]
    %v360 = vld [vmem:[#allocation6 + $0x760] sm:$0xff]
    %v361 = vld [vmem:[#allocation6 + $0x768] sm:$0xff]
    %v362 = vld [vmem:[#allocation6 + $0x770] sm:$0xff]
    %v363 = vld [vmem:[#allocation6 + $0x778] sm:$0xff]
    %v364 = vld [vmem:[#allocation6 + $0x780] sm:$0xff]
    %v365 = vld [vmem:[#allocation6 + $0x788] sm:$0xff]
    %v366 = vld [vmem:[#allocation6 + $0x790] sm:$0xff]
    %v367 = vld [vmem:[#allocation6 + $0x798] sm:$0xff]
    %v368 = vld [vmem:[#allocation6 + $0x7a0] sm:$0xff]
    %v369 = vld [vmem:[#allocation6 + $0x7a8] sm:$0xff]
    %v370 = vld [vmem:[#allocation6 + $0x7b0] sm:$0xff]
    %v371 = vld [vmem:[#allocation6 + $0x7b8] sm:$0xff]
    %v372 = vld [vmem:[#allocation6 + $0x7c0] sm:$0xff]
    %v373 = vld [vmem:[#allocation6 + $0x7c8] sm:$0xff]
    %v374 = vld [vmem:[#allocation6 + $0x7d0] sm:$0xff]
    %v375 = vld [vmem:[#allocation6 + $0x7d8] sm:$0xff]
    %v376 = vld [vmem:[#allocation6 + $0x7e0] sm:$0xff]
    %v377 = vld [vmem:[#allocation6 + $0x7e8] sm:$0xff]
    %v378 = vld [vmem:[#allocation6 + $0x7f0] sm:$0xff]
    %v379 = vld [vmem:[#allocation6 + $0x7f8] sm:$0xff]
    %v380 = vld [vmem:[%s2] sm:$0x3]
    %v382 = vlaneseq
    %v383 = vshrl.u32 %v382, 7
    %v384 = vsub.s32 0, %v383
    %v385 = vrot.slane %v380, %v384
    %v386 = vlaneseq
    %v387 = vshrl.u32 %v386, 7
    %v388 = vsub.s32 1, %v387
    %v389 = vrot.slane %v380, %v388
    %392 = vmatprep.subr.mxu0 %v125
    %393 = vmatpush1.msra.mxu0 %v124
    %394 = vmatprep.subr.mxu0 %v127
    %395 = vmatpush1.msra.mxu0 %v126
    %396 = vmatprep.subr.mxu0 %v129
    %397 = vmatpush1.msra.mxu0 %v128
    %398 = vmatprep.subr.mxu0 %v131
    %399 = vmatpush1.msra.mxu0 %v130
    %400 = vmatprep.subr.mxu0 %v133
    %401 = vmatpush1.msra.mxu0 %v132
    %402 = vmatprep.subr.mxu0 %v135
    %403 = vmatpush1.msra.mxu0 %v134
    %404 = vmatprep.subr.mxu0 %v137
    %405 = vmatpush1.msra.mxu0 %v136
    %406 = vmatprep.subr.mxu0 %v139
    %407 = vmatpush1.msra.mxu0 %v138
    %408 = vmatprep.subr.mxu0 %v141
    %409 = vmatpush1.msra.mxu0 %v140
    %410 = vmatprep.subr.mxu0 %v143
    %411 = vmatpush1.msra.mxu0 %v142
    %412 = vmatprep.subr.mxu0 %v145
    %413 = vmatpush1.msra.mxu0 %v144
    %414 = vmatprep.subr.mxu0 %v147
    %415 = vmatpush1.msra.mxu0 %v146
    %416 = vmatprep.subr.mxu0 %v149
    %417 = vmatpush1.msra.mxu0 %v148
    %418 = vmatprep.subr.mxu0 %v151
    %419 = vmatpush1.msra.mxu0 %v150
    %420 = vmatprep.subr.mxu0 %v153
    %421 = vmatpush1.msra.mxu0 %v152
    %422 = vmatprep.subr.mxu0 %v155
    %423 = vmatpush1.msra.mxu0 %v154
    %424 = vmatprep.subr.mxu0 %v157
    %425 = vmatpush1.msra.mxu0 %v156
    %426 = vmatprep.subr.mxu0 %v159
    %427 = vmatpush1.msra.mxu0 %v158
    %428 = vmatprep.subr.mxu0 %v161
    %429 = vmatpush1.msra.mxu0 %v160
    %430 = vmatprep.subr.mxu0 %v163
    %431 = vmatpush1.msra.mxu0 %v162
    %432 = vmatprep.subr.mxu0 %v165
    %433 = vmatpush1.msra.mxu0 %v164
    %434 = vmatprep.subr.mxu0 %v167
    %435 = vmatpush1.msra.mxu0 %v166
    %436 = vmatprep.subr.mxu0 %v169
    %437 = vmatpush1.msra.mxu0 %v168
    %438 = vmatprep.subr.mxu0 %v171
    %439 = vmatpush1.msra.mxu0 %v170
    %440 = vmatprep.subr.mxu0 %v173
    %441 = vmatpush1.msra.mxu0 %v172
    %442 = vmatprep.subr.mxu0 %v175
    %443 = vmatpush1.msra.mxu0 %v174
    %444 = vmatprep.subr.mxu0 %v177
    %445 = vmatpush1.msra.mxu0 %v176
    %446 = vmatprep.subr.mxu0 %v179
    %447 = vmatpush1.msra.mxu0 %v178
    %448 = vmatprep.subr.mxu0 %v181
    %449 = vmatpush1.msra.mxu0 %v180
    %450 = vmatprep.subr.mxu0 %v183
    %451 = vmatpush1.msra.mxu0 %v182
    %452 = vmatprep.subr.mxu0 %v185
    %453 = vmatpush1.msra.mxu0 %v184
    %454 = vmatprep.subr.mxu0 %v187
    %455 = vmatpush1.msra.mxu0 %v186
    %456 = vmatprep.mubr.f32.mxu0 %v117
    %457 = vmatmul.mubr.f32.gmra.mrb[0].mxu0 %v116
    %v458 = vpop.f32.mrb[0].mxu0
    %v459 = vadd.f32 %v385, %v458
    %v460 = vpop.f32.mrb[0].mxu0
    %v461 = vadd.f32 %v389, %v460
    %462 = vdwg.mxu0
    %463 = vmatprep.subr.mxu0 %v189
    %464 = vmatpush1.msra.mxu0 %v188
    %465 = vmatprep.subr.mxu0 %v191
    %466 = vmatpush1.msra.mxu0 %v190
    %467 = vmatprep.subr.mxu0 %v193
    %468 = vmatpush1.msra.mxu0 %v192
    %469 = vmatprep.subr.mxu0 %v195
    %470 = vmatpush1.msra.mxu0 %v194
    %471 = vmatprep.subr.mxu0 %v197
    %472 = vmatpush1.msra.mxu0 %v196
    %473 = vmatprep.subr.mxu0 %v199
    %474 = vmatpush1.msra.mxu0 %v198
    %475 = vmatprep.subr.mxu0 %v201
    %476 = vmatpush1.msra.mxu0 %v200
    %477 = vmatprep.subr.mxu0 %v203
    %478 = vmatpush1.msra.mxu0 %v202
    %479 = vmatprep.subr.mxu0 %v205
    %480 = vmatpush1.msra.mxu0 %v204
    %481 = vmatprep.subr.mxu0 %v207
    %482 = vmatpush1.msra.mxu0 %v206
    %483 = vmatprep.subr.mxu0 %v209
    %484 = vmatpush1.msra.mxu0 %v208
    %485 = vmatprep.subr.mxu0 %v211
    %486 = vmatpush1.msra.mxu0 %v210
    %487 = vmatprep.subr.mxu0 %v213
    %488 = vmatpush1.msra.mxu0 %v212
    %489 = vmatprep.subr.mxu0 %v215
    %490 = vmatpush1.msra.mxu0 %v214
    %491 = vmatprep.subr.mxu0 %v217
    %492 = vmatpush1.msra.mxu0 %v216
    %493 = vmatprep.subr.mxu0 %v219
    %494 = vmatpush1.msra.mxu0 %v218
    %495 = vmatprep.subr.mxu0 %v221
    %496 = vmatpush1.msra.mxu0 %v220
    %497 = vmatprep.subr.mxu0 %v223
    %498 = vmatpush1.msra.mxu0 %v222
    %499 = vmatprep.subr.mxu0 %v225
    %500 = vmatpush1.msra.mxu0 %v224
    %501 = vmatprep.subr.mxu0 %v227
    %502 = vmatpush1.msra.mxu0 %v226
    %503 = vmatprep.subr.mxu0 %v229
    %504 = vmatpush1.msra.mxu0 %v228
    %505 = vmatprep.subr.mxu0 %v231
    %506 = vmatpush1.msra.mxu0 %v230
    %507 = vmatprep.subr.mxu0 %v233
    %508 = vmatpush1.msra.mxu0 %v232
    %509 = vmatprep.subr.mxu0 %v235
    %510 = vmatpush1.msra.mxu0 %v234
    %511 = vmatprep.subr.mxu0 %v237
    %512 = vmatpush1.msra.mxu0 %v236
    %513 = vmatprep.subr.mxu0 %v239
    %514 = vmatpush1.msra.mxu0 %v238
    %515 = vmatprep.subr.mxu0 %v241
    %516 = vmatpush1.msra.mxu0 %v240
    %517 = vmatprep.subr.mxu0 %v243
    %518 = vmatpush1.msra.mxu0 %v242
    %519 = vmatprep.subr.mxu0 %v245
    %520 = vmatpush1.msra.mxu0 %v244
    %521 = vmatprep.subr.mxu0 %v247
    %522 = vmatpush1.msra.mxu0 %v246
    %523 = vmatprep.subr.mxu0 %v249
    %524 = vmatpush1.msra.mxu0 %v248
    %525 = vmatprep.subr.mxu0 %v251
    %526 = vmatpush1.msra.mxu0 %v250
    %527 = vmatprep.mubr.f32.mxu0 %v119
    %528 = vmatmul.mubr.f32.gmra.mrb[0].mxu0 %v118
    %v529 = vpop.f32.mrb[0].mxu0
    %v530 = vadd.f32 %v459, %v529
    %v531 = vpop.f32.mrb[0].mxu0
    %v532 = vadd.f32 %v461, %v531
    %533 = vdwg.mxu0
    %534 = vmatprep.subr.mxu0 %v253
    %535 = vmatpush1.msra.mxu0 %v252
    %536 = vmatprep.subr.mxu0 %v255
    %537 = vmatpush1.msra.mxu0 %v254
    %538 = vmatprep.subr.mxu0 %v257
    %539 = vmatpush1.msra.mxu0 %v256
    %540 = vmatprep.subr.mxu0 %v259
    %541 = vmatpush1.msra.mxu0 %v258
    %542 = vmatprep.subr.mxu0 %v261
    %543 = vmatpush1.msra.mxu0 %v260
    %544 = vmatprep.subr.mxu0 %v263
    %545 = vmatpush1.msra.mxu0 %v262
    %546 = vmatprep.subr.mxu0 %v265
    %547 = vmatpush1.msra.mxu0 %v264
    %548 = vmatprep.subr.mxu0 %v267
    %549 = vmatpush1.msra.mxu0 %v266
    %550 = vmatprep.subr.mxu0 %v269
    %551 = vmatpush1.msra.mxu0 %v268
    %552 = vmatprep.subr.mxu0 %v271
    %553 = vmatpush1.msra.mxu0 %v270
    %554 = vmatprep.subr.mxu0 %v273
    %555 = vmatpush1.msra.mxu0 %v272
    %556 = vmatprep.subr.mxu0 %v275
    %557 = vmatpush1.msra.mxu0 %v274
    %558 = vmatprep.subr.mxu0 %v277
    %559 = vmatpush1.msra.mxu0 %v276
    %560 = vmatprep.subr.mxu0 %v279
    %561 = vmatpush1.msra.mxu0 %v278
    %562 = vmatprep.subr.mxu0 %v281
    %563 = vmatpush1.msra.mxu0 %v280
    %564 = vmatprep.subr.mxu0 %v283
    %565 = vmatpush1.msra.mxu0 %v282
    %566 = vmatprep.subr.mxu0 %v285
    %567 = vmatpush1.msra.mxu0 %v284
    %568 = vmatprep.subr.mxu0 %v287
    %569 = vmatpush1.msra.mxu0 %v286
    %570 = vmatprep.subr.mxu0 %v289
    %571 = vmatpush1.msra.mxu0 %v288
    %572 = vmatprep.subr.mxu0 %v291
    %573 = vmatpush1.msra.mxu0 %v290
    %574 = vmatprep.subr.mxu0 %v293
    %575 = vmatpush1.msra.mxu0 %v292
    %576 = vmatprep.subr.mxu0 %v295
    %577 = vmatpush1.msra.mxu0 %v294
    %578 = vmatprep.subr.mxu0 %v297
    %579 = vmatpush1.msra.mxu0 %v296
    %580 = vmatprep.subr.mxu0 %v299
    %581 = vmatpush1.msra.mxu0 %v298
    %582 = vmatprep.subr.mxu0 %v301
    %583 = vmatpush1.msra.mxu0 %v300
    %584 = vmatprep.subr.mxu0 %v303
    %585 = vmatpush1.msra.mxu0 %v302
    %586 = vmatprep.subr.mxu0 %v305
    %587 = vmatpush1.msra.mxu0 %v304
    %588 = vmatprep.subr.mxu0 %v307
    %589 = vmatpush1.msra.mxu0 %v306
    %590 = vmatprep.subr.mxu0 %v309
    %591 = vmatpush1.msra.mxu0 %v308
    %592 = vmatprep.subr.mxu0 %v311
    %593 = vmatpush1.msra.mxu0 %v310
    %594 = vmatprep.subr.mxu0 %v313
    %595 = vmatpush1.msra.mxu0 %v312
    %596 = vmatprep.subr.mxu0 %v315
    %597 = vmatpush1.msra.mxu0 %v314
    %598 = vmatprep.mubr.f32.mxu0 %v121
    %599 = vmatmul.mubr.f32.gmra.mrb[0].mxu0 %v120
    %v600 = vpop.f32.mrb[0].mxu0
    %v601 = vadd.f32 %v530, %v600
    %v602 = vpop.f32.mrb[0].mxu0
    %v603 = vadd.f32 %v532, %v602
    %604 = vdwg.mxu0
    %605 = vmatprep.subr.mxu0 %v317
    %606 = vmatpush1.msra.mxu0 %v316
    %607 = vmatprep.subr.mxu0 %v319
    %608 = vmatpush1.msra.mxu0 %v318
    %609 = vmatprep.subr.mxu0 %v321
    %610 = vmatpush1.msra.mxu0 %v320
    %611 = vmatprep.subr.mxu0 %v323
    %612 = vmatpush1.msra.mxu0 %v322
    %613 = vmatprep.subr.mxu0 %v325
    %614 = vmatpush1.msra.mxu0 %v324
    %615 = vmatprep.subr.mxu0 %v327
    %616 = vmatpush1.msra.mxu0 %v326
    %617 = vmatprep.subr.mxu0 %v329
    %618 = vmatpush1.msra.mxu0 %v328
    %619 = vmatprep.subr.mxu0 %v331
    %620 = vmatpush1.msra.mxu0 %v330
    %621 = vmatprep.subr.mxu0 %v333
    %622 = vmatpush1.msra.mxu0 %v332
    %623 = vmatprep.subr.mxu0 %v335
    %624 = vmatpush1.msra.mxu0 %v334
    %625 = vmatprep.subr.mxu0 %v337
    %626 = vmatpush1.msra.mxu0 %v336
    %627 = vmatprep.subr.mxu0 %v339
    %628 = vmatpush1.msra.mxu0 %v338
    %629 = vmatprep.subr.mxu0 %v341
    %630 = vmatpush1.msra.mxu0 %v340
    %631 = vmatprep.subr.mxu0 %v343
    %632 = vmatpush1.msra.mxu0 %v342
    %633 = vmatprep.subr.mxu0 %v345
    %634 = vmatpush1.msra.mxu0 %v344
    %635 = vmatprep.subr.mxu0 %v347
    %636 = vmatpush1.msra.mxu0 %v346
    %637 = vmatprep.subr.mxu0 %v349
    %638 = vmatpush1.msra.mxu0 %v348
    %639 = vmatprep.subr.mxu0 %v351
    %640 = vmatpush1.msra.mxu0 %v350
    %641 = vmatprep.subr.mxu0 %v353
    %642 = vmatpush1.msra.mxu0 %v352
    %643 = vmatprep.subr.mxu0 %v355
    %644 = vmatpush1.msra.mxu0 %v354
    %645 = vmatprep.subr.mxu0 %v357
    %646 = vmatpush1.msra.mxu0 %v356
    %647 = vmatprep.subr.mxu0 %v359
    %648 = vmatpush1.msra.mxu0 %v358
    %649 = vmatprep.subr.mxu0 %v361
    %650 = vmatpush1.msra.mxu0 %v360
    %651 = vmatprep.subr.mxu0 %v363
    %652 = vmatpush1.msra.mxu0 %v362
    %653 = vmatprep.subr.mxu0 %v365
    %654 = vmatpush1.msra.mxu0 %v364
    %655 = vmatprep.subr.mxu0 %v367
    %656 = vmatpush1.msra.mxu0 %v366
    %657 = vmatprep.subr.mxu0 %v369
    %658 = vmatpush1.msra.mxu0 %v368
    %659 = vmatprep.subr.mxu0 %v371
    %660 = vmatpush1.msra.mxu0 %v370
    %661 = vmatprep.subr.mxu0 %v373
    %662 = vmatpush1.msra.mxu0 %v372
    %663 = vmatprep.subr.mxu0 %v375
    %664 = vmatpush1.msra.mxu0 %v374
    %665 = vmatprep.subr.mxu0 %v377
    %666 = vmatpush1.msra.mxu0 %v376
    %667 = vmatprep.subr.mxu0 %v379
    %668 = vmatpush1.msra.mxu0 %v378
    %669 = vmatprep.mubr.f32.mxu0 %v123
    %670 = vmatmul.mubr.f32.gmra.mrb[0].mxu0 %v122
    %v671 = vpop.f32.mrb[0].mxu0
    %v672 = vadd.f32 %v601, %v671
    %v673 = vpop.f32.mrb[0].mxu0
    %v674 = vadd.f32 %v603, %v673
    %675 = vdwg.mxu0
    %v676 = vld [vmem:[#allocation3] sm:$0x1]
    %s677 = vtos %v676
    %s678 = ssub.f32 0.0, %s677
    %v679 = vstv %s678
    %v680 = vmul.f32 %v679, 1.442695
    %v681 = vpow.pop %v680
    %s682 = vtos %v681
    %v683 = vld [vmem:[#allocation8] sm:$0xff]
    %v684 = vld [vmem:[#allocation8 + $0x8] sm:$0xff]
    %v685 = vld [vmem:[#allocation8 + $0x10] sm:$0xff]
    %v686 = vld [vmem:[#allocation8 + $0x18] sm:$0xff]
    %v687 = vld [vmem:[#allocation8 + $0x20] sm:$0xff]
    %v688 = vld [vmem:[#allocation8 + $0x28] sm:$0xff]
    %v689 = vld [vmem:[#allocation8 + $0x30] sm:$0xff]
    %v690 = vld [vmem:[#allocation8 + $0x38] sm:$0xff]
    %691 = vmatprep.subr.mxu0 %v684
    %692 = vmatpush1.xpose.msra.mxu0 %v683
    %693 = vmatprep.subr.mxu0 %v686
    %694 = vmatpush1.xpose.msra.mxu0 %v685
    %695 = vmatprep.subr.mxu0 %v688
    %696 = vmatpush1.xpose.msra.mxu0 %v687
    %697 = vmatprep.subr.mxu0 %v690
    %698 = vmatpush1.xpose.msra.mxu0 %v689
    %699 = vmatprep.subr.mxu0 0.0
    %700 = vmatpush1.xpose.msra.mxu0 0.0
    %701 = vmatprep.subr.mxu0 0.0
    %702 = vmatpush1.xpose.msra.mxu0 0.0
    %703 = vmatprep.subr.mxu0 0.0
    %704 = vmatpush1.xpose.msra.mxu0 0.0
    %705 = vmatprep.subr.mxu0 0.0
    %706 = vmatpush1.xpose.msra.mxu0 0.0
    %707 = vmatprep.subr.mxu0 0.0
    %708 = vmatpush1.xpose.msra.mxu0 0.0
    %709 = vmatprep.subr.mxu0 0.0
    %710 = vmatpush1.xpose.msra.mxu0 0.0
    %711 = vmatprep.subr.mxu0 0.0
    %712 = vmatpush1.xpose.msra.mxu0 0.0
    %713 = vmatprep.subr.mxu0 0.0
    %714 = vmatpush1.xpose.msra.mxu0 0.0
    %715 = vmatprep.subr.mxu0 0.0
    %716 = vmatpush1.xpose.msra.mxu0 0.0
    %717 = vmatprep.subr.mxu0 0.0
    %718 = vmatpush1.xpose.msra.mxu0 0.0
    %719 = vmatprep.subr.mxu0 0.0
    %720 = vmatpush1.xpose.msra.mxu0 0.0
    %721 = vmatprep.subr.mxu0 0.0
    %722 = vmatpush1.xpose.msra.mxu0 0.0
    %723 = vmatprep.subr.mxu0 0.0
    %724 = vmatpush1.xpose.msra.mxu0 0.0
    %725 = vmatprep.subr.mxu0 0.0
    %726 = vmatpush1.xpose.msra.mxu0 0.0
    %727 = vmatprep.subr.mxu0 0.0
    %728 = vmatpush1.xpose.msra.mxu0 0.0
    %729 = vmatprep.subr.mxu0 0.0
    %730 = vmatpush1.xpose.msra.mxu0 0.0
    %731 = vmatprep.subr.mxu0 0.0
    %732 = vmatpush1.xpose.msra.mxu0 0.0
    %733 = vmatprep.subr.mxu0 0.0
    %734 = vmatpush1.xpose.msra.mxu0 0.0
    %735 = vmatprep.subr.mxu0 0.0
    %736 = vmatpush1.xpose.msra.mxu0 0.0
    %737 = vmatprep.subr.mxu0 0.0
    %738 = vmatpush1.xpose.msra.mxu0 0.0
    %739 = vmatprep.subr.mxu0 0.0
    %740 = vmatpush1.xpose.msra.mxu0 0.0
    %741 = vmatprep.subr.mxu0 0.0
    %742 = vmatpush1.xpose.msra.mxu0 0.0
    %743 = vmatprep.subr.mxu0 0.0
    %744 = vmatpush1.xpose.msra.mxu0 0.0
    %745 = vmatprep.subr.mxu0 0.0
    %746 = vmatpush1.xpose.msra.mxu0 0.0
    %747 = vmatprep.subr.mxu0 0.0
    %748 = vmatpush1.xpose.msra.mxu0 0.0
    %749 = vmatprep.subr.mxu0 0.0
    %750 = vmatpush1.xpose.msra.mxu0 0.0
    %751 = vmatprep.subr.mxu0 0.0
    %752 = vmatpush1.xpose.msra.mxu0 0.0
    %753 = vmatprep.subr.mxu0 0.0
    %754 = vmatpush1.xpose.msra.mxu0 0.0
    %755 = vmatprep.mubr.f32.mxu0 %v674
    %756 = vmatmul.mubr.f32.gmra.mrb[0].mxu0 %v672
    %v757 = vpop.f32.mrb[0].mxu0
    %v758 = vadd.f32 0.0, %v757
    %v759 = vpop.f32.mrb[0].mxu0
    %760 = vdwg.mxu0
    %v761 = vstv %s682
    %v762 = vmul.f32 %v758, %v761
    %v763 = vld [vmem:[%s4] sm:$0x3]
    %v765 = vlaneseq
    %v766 = vshrl.u32 %v765, 7
    %v767 = vsub.s32 0, %v766
    %v768 = vrot.slane %v763, %v767
    %v769 = vlaneseq
    %v770 = vshrl.u32 %v769, 7
    %v771 = vsub.s32 1, %v770
    %v772 = vrot.slane %v763, %v771
    %v775 = vmul.f32 %v672, %v768
    %v776 = vmul.f32 %v674, %v772
    %v777 = vadd.f32 %v775, %v776
    %778 = vadd.xlane.f32.xlu0 %v777
    %v779 = vpop.xlane.xlu0 %778
    %v780 = vmul.f32 %v779, %v761
    %v781 = vld [vmem:[%s5] sm:$0xff]
    %v783 = vlaneseq
    %v784 = vshrl.u32 %v783, 7
    %v785 = vsub.s32 0, %v784
    %v786 = vrot.slane %v781, %v785
    %v787 = vlaneseq
    %v788 = vshrl.u32 %v787, 7
    %v789 = vsub.s32 1, %v788
    %v790 = vrot.slane %v781, %v789
    %v791 = vlaneseq
    %v792 = vshrl.u32 %v791, 7
    %v793 = vsub.s32 2, %v792
    %v794 = vrot.slane %v781, %v793
    %v795 = vlaneseq
    %v796 = vshrl.u32 %v795, 7
    %v797 = vsub.s32 3, %v796
    %v798 = vrot.slane %v781, %v797
    %v799 = vlaneseq
    %v800 = vshrl.u32 %v799, 7
    %v801 = vsub.s32 4, %v800
    %v802 = vrot.slane %v781, %v801
    %v803 = vlaneseq
    %v804 = vshrl.u32 %v803, 7
    %v805 = vsub.s32 5, %v804
    %v806 = vrot.slane %v781, %v805
    %v807 = vlaneseq
    %v808 = vshrl.u32 %v807, 7
    %v809 = vsub.s32 6, %v808
    %v810 = vrot.slane %v781, %v809
    %v811 = vlaneseq
    %v812 = vshrl.u32 %v811, 7
    %v813 = vsub.s32 7, %v812
    %v814 = vrot.slane %v781, %v813
    %v823 = vmul.f32 %v108, %v786
    %v824 = vmul.f32 %v109, %v790
    %v825 = vmul.f32 %v110, %v794
    %v826 = vmul.f32 %v111, %v798
    %v827 = vmul.f32 %v112, %v802
    %v828 = vmul.f32 %v113, %v806
    %v829 = vmul.f32 %v114, %v810
    %v830 = vmul.f32 %v115, %v814
    %v831 = vadd.f32 %v823, %v824
    %v832 = vadd.f32 %v831, %v825
    %v833 = vadd.f32 %v832, %v826
    %v834 = vadd.f32 %v833, %v827
    %v835 = vadd.f32 %v834, %v828
    %v836 = vadd.f32 %v835, %v829
    %v837 = vadd.f32 %v836, %v830
    %838 = vadd.xlane.f32.xlu0 %v837
    %v839 = vpop.xlane.xlu0 %838
    %v840 = vld [vmem:[#allocation2] sm:$0x1]
    %s841 = vtos %v840
    %v842 = vstv %s841
    %v843 = vadd.f32 %v839, %v842
    %vm844 = vcmask 261120
    %845 = vst.msk [vmem:[%s8] sm:$0xff] %vm844, %v762
    %v846 = vadd.f32 %v780, %v843
    %vm847 = vcmask 7168
    %848 = vst.msk [vmem:[%s9] sm:$0xff] %vm847, %v846
    // Predicated region
    $region46: #{test_align_forward.2} parent=1 // pred_check
      _
    $region47: #{test_align_forward.2} parent=1 // pred_check_branch
      %850 = sbr.rel (0) target = $region49
    $region48: #{test_align_forward.2} parent=1 // pred_region
      _
    $region49: #{test_align_forward.2} parent=1 // pred_fallthru
      _
    // Predicated region
    $region50: #{test_align_forward.2} parent=1 // pred_check
      _
    $region51: #{test_align_forward.2} parent=1 // pred_check_branch
      %852 = sbr.rel (0) target = $region53
    $region52: #{test_align_forward.2} parent=1 // pred_region
      _
    $region53: #{test_align_forward.2} parent=1 // pred_fallthru
      _
    // Predicated region
    $region54: #{test_align_forward.2} parent=1 // pred_check
      _
    $region55: #{test_align_forward.2} parent=1 // pred_check_branch
      %854 = sbr.rel (0) target = $region57
    $region56: #{test_align_forward.2} parent=1 // pred_region
      _
    $region57: #{test_align_forward.2} parent=1 // pred_fallthru
      _
    // Predicated region
    $region58: #{test_align_forward.2} parent=1 // pred_check
      _
    $region59: #{test_align_forward.2} parent=1 // pred_check_branch
      %856 = sbr.rel (0) target = $region61
    $region60: #{test_align_forward.2} parent=1 // pred_region
      _
    $region61: #{test_align_forward.2} parent=1 // pred_fallthru
      _
    %857 = vsyncpa [#allocation5], 1
    %858 = vsyncpa [#allocation7], 1

</llo_original>
